<compile_context>
chip_gen: v6e
topology: v6e:2x2x1
jax: 0.10.0
libtpu: 0.0.40
codegen_flags: <defaults>
</compile_context>

<pallas_src>
import functools

import jax
import jax.numpy as jnp
import numpy as np
from jax.experimental import pallas as pl
from jax.experimental.pallas import tpu as pltpu

KS = 5        # depthwise kernel size
PAD = 2       # padding of the 5x5 depthwise conv (stride 1 -> same spatial size)
BN_EPS = 1e-5


def _conv1x1(x, w_oi):
    """Pointwise conv: x (Cin, P), w_oi (Cout, Cin) -> (Cout, P).

    Small channel counts: broadcast multiply-adds on the VPU (MXU at K=4 would
    be <3% utilized and pay fill/drain latency).  MXU-sized channels: jnp.dot.
    """
    c_out, c_in = w_oi.shape
    if c_in >= 128 and c_out >= 8:
        # TODO(synk): for large C on v6e/v7x cast operands to bf16 (keep
        # preferred_element_type=f32) to hit the fast MXU path.
        return jnp.dot(w_oi, x, preferred_element_type=jnp.float32)
    acc = w_oi[:, 0:1] * x[0:1, :]
    for ci in range(1, c_in):
        acc = acc + w_oi[:, ci:ci + 1] * x[ci:ci + 1, :]
    return acc


def _basic_block_kernel(x_ref, row_ref, col_ref, w1_ref, b1_ref, dw_ref,
                        b2_ref, w3_ref, b3_ref, o_ref, *, height, width,
                        groups):
    """Fused BasicBlock: branch convs + concat + channel shuffle.

    x_ref/o_ref blocks: (bb, 2C, H*W) with H*W on the lane axis.
    row_ref/col_ref:    (1, H*W) int32 spatial indices (precomputed host-side
                        so the kernel needs no integer div/mod).
    Conv weights carry folded BN scales; b*_ref are folded shifts of shape (C, 1).
    """
    bb, cin, hw = x_ref.shape
    c = cin // 2

    w1 = w1_ref[...]
    b1 = b1_ref[...]
    dwk = dw_ref[...]            # (C, 25), tap index = (dh+2)*5 + (dw+2)
    b2 = b2_ref[...]
    w3 = w3_ref[...]
    b3 = b3_ref[...]
    row = row_ref[...]
    col = col_ref[...]

    # Hoisted per-tap constants: kernel columns, float boundary masks and roll
    # shifts (JAX does not CSE broadcasts -> build once, outside all loops).
    offs = [d - PAD for d in range(KS)]
    h_okf = [(((row + dh) >= 0) & ((row + dh) < height)).astype(jnp.float32)
             for dh in offs]
    w_okf = [(((col + dw) >= 0) & ((col + dw) < width)).astype(jnp.float32)
             for dw in offs]
    ktaps = [dwk[:, t:t + 1] for t in range(KS * KS)]
    shifts = [(-(dh * width + dw)) % hw for dh in offs for dw in offs]

    for b in range(bb):
        xb = x_ref[b].astype(jnp.float32)          # (2C, HW)
        x1 = xb[:c, :]                             # passthrough half
        x2 = xb[c:, :]                             # conv-branch input

        # conv1: 1x1 conv + folded BN + ReLU
        h1 = jnp.maximum(_conv1x1(x2, w1) + b1, 0.0)

        # conv2: 5x5 depthwise conv (pad 2) + folded BN, fully in vregs: each
        # tap is a lane roll of the flattened spatial axis (XLU slot) masked
        # at the image borders.
        acc = jnp.zeros((c, hw), jnp.float32)
        t = 0
        for i in range(KS):
            for j in range(KS):
                shifted = h1 if shifts[t] == 0 else pltpu.roll(
                    h1, shift=shifts[t], axis=1)
                acc = acc + (shifted * ktaps[t]) * (h_okf[i] * w_okf[j])
                t += 1
        h2 = acc + b2

        # conv3: 1x1 conv + folded BN + ReLU
        y2 = jnp.maximum(_conv1x1(h2, w3) + b3, 0.0)

        # Epilogue: concat([x1, y2]) + channel shuffle fused into the output
        # stores.  Shuffled out-channel j reads concatenated channel
        # (j % g) * (cin // g) + (j // g).  Each store is a lane-dense (1, HW) row.
        for jdst in range(cin):
            src = (jdst % groups) * (cin // groups) + (jdst // groups)
            if src < c:
                vrow = x1[src:src + 1, :]
            else:
                vrow = y2[src - c:src - c + 1, :]
            o_ref[b, jdst:jdst + 1, :] = vrow.astype(o_ref.dtype)


def _basic_block_pallas(x_flat, row_idx, col_idx, w1f, b1c, dwf, b2c, w3f,
                        b3c, *, height, width, groups):
    n, cin, hw = x_flat.shape
    c = cin // 2

    # Batch tiling: keep >=2 grid steps when possible (feeds both v7x
    # TensorCores via the "parallel" axis) while keeping the serial step count
    # minimal on single-TC v5e/v6e (~0.35us per grid step of overhead).
    if n >= 2 and n % 2 == 0:
        bb, steps = n // 2, 2
    else:
        bb, steps = 1, n

    kernel = functools.partial(_basic_block_kernel, height=height,
                               width=width, groups=groups)
    return pl.pallas_call(
        kernel,
        out_shape=jax.ShapeDtypeStruct((n, cin, hw), jnp.float32),
        grid=(steps,),
        in_specs=[
            pl.BlockSpec((bb, cin, hw), lambda i: (i, 0, 0)),
            pl.BlockSpec((1, hw), lambda i: (0, 0)),
            pl.BlockSpec((1, hw), lambda i: (0, 0)),
            pl.BlockSpec((c, c), lambda i: (0, 0)),
            pl.BlockSpec((c, 1), lambda i: (0, 0)),
            pl.BlockSpec((c, KS * KS), lambda i: (0, 0)),
            pl.BlockSpec((c, 1), lambda i: (0, 0)),
            pl.BlockSpec((c, c), lambda i: (0, 0)),
            pl.BlockSpec((c, 1), lambda i: (0, 0)),
        ],
        out_specs=pl.BlockSpec((bb, cin, hw), lambda i: (i, 0, 0)),
        compiler_params=pltpu.CompilerParams(
            dimension_semantics=("parallel",)),
        # TODO(synk): for real ShuffleNet shapes (H,W up to 112) tile the
        # spatial axis with a 2-row halo so blocks fit v7x's 64 MiB VMEM.
    )(x_flat, row_idx, col_idx, w1f, b1c, dwf, b2c, w3f, b3c)


# ----------------------------------------------------------------------------
# Parameter setup (deterministic, synthetic) + BN folding
# ----------------------------------------------------------------------------
def init_params(key, channels):
    ks = jax.random.split(key, 15)

    def kaiming(k, shape, fan_in):
        return jax.random.normal(k, shape, jnp.float32) * jnp.sqrt(2.0 / fan_in)

    def bn_params(k0, k1, k2, k3):
        return dict(
            gamma=1.0 + 0.1 * jax.random.normal(k0, (channels,), jnp.float32),
            beta=0.1 * jax.random.normal(k1, (channels,), jnp.float32),
            mean=0.1 * jax.random.normal(k2, (channels,), jnp.float32),
            var=jnp.abs(jax.random.normal(k3, (channels,), jnp.float32)) + 0.5,
        )

    return dict(
        w1=kaiming(ks[0], (channels, channels), channels),       # (out, in)
        dw=kaiming(ks[1], (channels, KS, KS), KS * KS),          # (c, kh, kw)
        w3=kaiming(ks[2], (channels, channels), channels),       # (out, in)
        bn1=bn_params(ks[3], ks[4], ks[5], ks[6]),
        bn2=bn_params(ks[7], ks[8], ks[9], ks[10]),
        bn3=bn_params(ks[11], ks[12], ks[13], ks[14]),
    )


def _fold_bn(bn):
    s = bn["gamma"] / jnp.sqrt(bn["var"] + BN_EPS)
    return s, bn["beta"] - bn["mean"] * s


# ----------------------------------------------------------------------------
# Full BasicBlock forward (NCHW in / NCHW out, like PyTorch)
# ----------------------------------------------------------------------------
@functools.partial(jax.jit, static_argnames=("shuffle_groups",))
def basic_block_forward(x_nchw, params, shuffle_groups=2):
    n, cin, h, w = x_nchw.shape
    c = cin // 2
    hw = h * w

    s1, sh1 = _fold_bn(params["bn1"])
    s2, sh2 = _fold_bn(params["bn2"])
    s3, sh3 = _fold_bn(params["bn3"])
    w1f = params["w1"] * s1[:, None]
    dwf = (params["dw"] * s2[:, None, None]).reshape(c, KS * KS)
    w3f = params["w3"] * s3[:, None]

    # Spatial row/col indices for the depthwise boundary masks.
    pos = jnp.arange(hw, dtype=jnp.int32)
    row_idx = (pos // w).reshape(1, hw)
    col_idx = (pos % w).reshape(1, hw)

    # NCHW -> (N, C, H*W) is a pure reshape (no HBM transpose); channel split,
    # concat and channel shuffle all happen inside the kernel.
    x_flat = x_nchw.reshape(n, cin, hw).astype(jnp.float32)

    out_flat = _basic_block_pallas(
        x_flat, row_idx, col_idx, w1f, sh1[:, None], dwf, sh2[:, None],
        w3f, sh3[:, None], height=h, width=w, groups=shuffle_groups)
    return out_flat.reshape(n, cin, h, w)


# ----------------------------------------------------------------------------
# Pure-JAX reference (for correctness verification only)
# ----------------------------------------------------------------------------
def _reference_forward(x_nchw, params, shuffle_groups=2):
    n, cin, h, w = x_nchw.shape
    c = cin // 2
    x1, x2 = x_nchw[:, :c], x_nchw[:, c:]

    def bn(y, p):
        s = p["gamma"] / jnp.sqrt(p["var"] + BN_EPS)
        return y * s[None, :, None, None] + \
            (p["beta"] - p["mean"] * s)[None, :, None, None]

    y = jnp.einsum("nchw,oc->nohw", x2, params["w1"])
    y = jnp.maximum(bn(y, params["bn1"]), 0.0)
    dwk = params["dw"][:, None]                      # (C, 1, 5, 5) OIHW
    y = jax.lax.conv_general_dilated(
        y, dwk, (1, 1), ((PAD, PAD), (PAD, PAD)),
        dimension_numbers=("NCHW", "OIHW", "NCHW"), feature_group_count=c)
    y = bn(y, params["bn2"])
    y = jnp.einsum("nchw,oc->nohw", y, params["w3"])
    y = jnp.maximum(bn(y, params["bn3"]), 0.0)

    out = jnp.concatenate([x1, y], axis=1)
    g = shuffle_groups
    out = out.reshape(n, g, cin // g, h, w)
    return jnp.transpose(out, (0, 2, 1, 3, 4)).reshape(n, cin, h, w)


if __name__ == "__main__":
    key = jax.random.PRNGKey(0)
    kx, kp = jax.random.split(key)

    N, C_IN, H, W = 2, 8, 16, 16          # in_channels=8 -> branch channels=4
    x = jax.random.normal(kx, (N, C_IN, H, W), jnp.float32)
    params = init_params(kp, C_IN // 2)

    out = basic_block_forward(x, params, shuffle_groups=2)
    out = jax.block_until_ready(out)
    assert out.shape == (N, C_IN, H, W)

    ref = _reference_forward(x, params, shuffle_groups=2)
    np.testing.assert_allclose(np.asarray(out), np.asarray(ref),
                               rtol=1e-4, atol=1e-4)
    print("KERNEL_OK")
</pallas_src>

<mosaic_0001>
module attributes {stable_mosaic.version = 11 : i64} {
  func.func @_basic_block_kernel(%arg0: i32, %arg1: memref<1x8x256xf32, #tpu.memory_space<vmem>>, %arg2: memref<1x256xi32, #tpu.memory_space<vmem>>, %arg3: memref<1x256xi32, #tpu.memory_space<vmem>>, %arg4: memref<4x4xf32, #tpu.memory_space<vmem>>, %arg5: memref<4x1xf32, #tpu.memory_space<vmem>>, %arg6: memref<4x25xf32, #tpu.memory_space<vmem>>, %arg7: memref<4x1xf32, #tpu.memory_space<vmem>>, %arg8: memref<4x4xf32, #tpu.memory_space<vmem>>, %arg9: memref<4x1xf32, #tpu.memory_space<vmem>>, %arg10: memref<1x8x256xf32, #tpu.memory_space<vmem>>) attributes {dimension_semantics = [#tpu.dimension_semantics<parallel>], iteration_bounds = array<i64: 2>, scalar_prefetch = 0 : i64, scratch_operands = 0 : i64, tpu.core_type = #tpu.core_type<tc>, window_params = [{transform_indices = @transform_0, window_bounds = array<i64: 1, 8, 256>}, {pipeline_mode = #tpu.pipeline_mode<synchronous>, transform_indices = @transform_1, window_bounds = array<i64: 1, 256>}, {pipeline_mode = #tpu.pipeline_mode<synchronous>, transform_indices = @transform_2, window_bounds = array<i64: 1, 256>}, {pipeline_mode = #tpu.pipeline_mode<synchronous>, transform_indices = @transform_3, window_bounds = array<i64: 4, 4>}, {pipeline_mode = #tpu.pipeline_mode<synchronous>, transform_indices = @transform_4, window_bounds = array<i64: 4, 1>}, {pipeline_mode = #tpu.pipeline_mode<synchronous>, transform_indices = @transform_5, window_bounds = array<i64: 4, 25>}, {pipeline_mode = #tpu.pipeline_mode<synchronous>, transform_indices = @transform_6, window_bounds = array<i64: 4, 1>}, {pipeline_mode = #tpu.pipeline_mode<synchronous>, transform_indices = @transform_7, window_bounds = array<i64: 4, 4>}, {pipeline_mode = #tpu.pipeline_mode<synchronous>, transform_indices = @transform_8, window_bounds = array<i64: 4, 1>}, {transform_indices = @transform_9, window_bounds = array<i64: 1, 8, 256>}]} {
    %c0 = arith.constant 0 : index
    %c0_0 = arith.constant 0 : index
    %0 = vector.load %arg4[%c0, %c0_0] : memref<4x4xf32, #tpu.memory_space<vmem>>, vector<4x4xf32>
    %c0_1 = arith.constant 0 : index
    %c0_2 = arith.constant 0 : index
    %1 = vector.load %arg5[%c0_1, %c0_2] : memref<4x1xf32, #tpu.memory_space<vmem>>, vector<4x1xf32>
    %c0_3 = arith.constant 0 : index
    %c0_4 = arith.constant 0 : index
    %2 = vector.load %arg6[%c0_3, %c0_4] : memref<4x25xf32, #tpu.memory_space<vmem>>, vector<4x25xf32>
    %c0_5 = arith.constant 0 : index
    %c0_6 = arith.constant 0 : index
    %3 = vector.load %arg7[%c0_5, %c0_6] : memref<4x1xf32, #tpu.memory_space<vmem>>, vector<4x1xf32>
    %c0_7 = arith.constant 0 : index
    %c0_8 = arith.constant 0 : index
    %4 = vector.load %arg8[%c0_7, %c0_8] : memref<4x4xf32, #tpu.memory_space<vmem>>, vector<4x4xf32>
    %c0_9 = arith.constant 0 : index
    %c0_10 = arith.constant 0 : index
    %5 = vector.load %arg9[%c0_9, %c0_10] : memref<4x1xf32, #tpu.memory_space<vmem>>, vector<4x1xf32>
    %c0_11 = arith.constant 0 : index
    %c0_12 = arith.constant 0 : index
    %6 = vector.load %arg2[%c0_11, %c0_12] : memref<1x256xi32, #tpu.memory_space<vmem>>, vector<1x256xi32>
    %c0_13 = arith.constant 0 : index
    %c0_14 = arith.constant 0 : index
    %7 = vector.load %arg3[%c0_13, %c0_14] : memref<1x256xi32, #tpu.memory_space<vmem>>, vector<1x256xi32>
    %c-2_i32 = arith.constant -2 : i32
    %8 = vector.broadcast %c-2_i32 : i32 to vector<1x256xi32>
    %9 = arith.addi %6, %8 : vector<1x256xi32>
    %c0_i32 = arith.constant 0 : i32
    %10 = vector.broadcast %c0_i32 : i32 to vector<1x256xi32>
    %11 = arith.cmpi sge, %9, %10 : vector<1x256xi32>
    %c-2_i32_15 = arith.constant -2 : i32
    %12 = vector.broadcast %c-2_i32_15 : i32 to vector<1x256xi32>
    %13 = arith.addi %6, %12 : vector<1x256xi32>
    %c16_i32 = arith.constant 16 : i32
    %14 = vector.broadcast %c16_i32 : i32 to vector<1x256xi32>
    %15 = arith.cmpi slt, %13, %14 : vector<1x256xi32>
    %16 = arith.andi %11, %15 : vector<1x256xi1>
    %17 = arith.extui %16 : vector<1x256xi1> to vector<1x256xi32>
    %18 = arith.sitofp %17 : vector<1x256xi32> to vector<1x256xf32>
    %c-1_i32 = arith.constant -1 : i32
    %19 = vector.broadcast %c-1_i32 : i32 to vector<1x256xi32>
    %20 = arith.addi %6, %19 : vector<1x256xi32>
    %c0_i32_16 = arith.constant 0 : i32
    %21 = vector.broadcast %c0_i32_16 : i32 to vector<1x256xi32>
    %22 = arith.cmpi sge, %20, %21 : vector<1x256xi32>
    %c-1_i32_17 = arith.constant -1 : i32
    %23 = vector.broadcast %c-1_i32_17 : i32 to vector<1x256xi32>
    %24 = arith.addi %6, %23 : vector<1x256xi32>
    %c16_i32_18 = arith.constant 16 : i32
    %25 = vector.broadcast %c16_i32_18 : i32 to vector<1x256xi32>
    %26 = arith.cmpi slt, %24, %25 : vector<1x256xi32>
    %27 = arith.andi %22, %26 : vector<1x256xi1>
    %28 = arith.extui %27 : vector<1x256xi1> to vector<1x256xi32>
    %29 = arith.sitofp %28 : vector<1x256xi32> to vector<1x256xf32>
    %c0_i32_19 = arith.constant 0 : i32
    %30 = vector.broadcast %c0_i32_19 : i32 to vector<1x256xi32>
    %31 = arith.addi %6, %30 : vector<1x256xi32>
    %c0_i32_20 = arith.constant 0 : i32
    %32 = vector.broadcast %c0_i32_20 : i32 to vector<1x256xi32>
    %33 = arith.cmpi sge, %31, %32 : vector<1x256xi32>
    %c0_i32_21 = arith.constant 0 : i32
    %34 = vector.broadcast %c0_i32_21 : i32 to vector<1x256xi32>
    %35 = arith.addi %6, %34 : vector<1x256xi32>
    %c16_i32_22 = arith.constant 16 : i32
    %36 = vector.broadcast %c16_i32_22 : i32 to vector<1x256xi32>
    %37 = arith.cmpi slt, %35, %36 : vector<1x256xi32>
    %38 = arith.andi %33, %37 : vector<1x256xi1>
    %39 = arith.extui %38 : vector<1x256xi1> to vector<1x256xi32>
    %40 = arith.sitofp %39 : vector<1x256xi32> to vector<1x256xf32>
    %c1_i32 = arith.constant 1 : i32
    %41 = vector.broadcast %c1_i32 : i32 to vector<1x256xi32>
    %42 = arith.addi %6, %41 : vector<1x256xi32>
    %c0_i32_23 = arith.constant 0 : i32
    %43 = vector.broadcast %c0_i32_23 : i32 to vector<1x256xi32>
    %44 = arith.cmpi sge, %42, %43 : vector<1x256xi32>
    %c1_i32_24 = arith.constant 1 : i32
    %45 = vector.broadcast %c1_i32_24 : i32 to vector<1x256xi32>
    %46 = arith.addi %6, %45 : vector<1x256xi32>
    %c16_i32_25 = arith.constant 16 : i32
    %47 = vector.broadcast %c16_i32_25 : i32 to vector<1x256xi32>
    %48 = arith.cmpi slt, %46, %47 : vector<1x256xi32>
    %49 = arith.andi %44, %48 : vector<1x256xi1>
    %50 = arith.extui %49 : vector<1x256xi1> to vector<1x256xi32>
    %51 = arith.sitofp %50 : vector<1x256xi32> to vector<1x256xf32>
    %c2_i32 = arith.constant 2 : i32
    %52 = vector.broadcast %c2_i32 : i32 to vector<1x256xi32>
    %53 = arith.addi %6, %52 : vector<1x256xi32>
    %c0_i32_26 = arith.constant 0 : i32
    %54 = vector.broadcast %c0_i32_26 : i32 to vector<1x256xi32>
    %55 = arith.cmpi sge, %53, %54 : vector<1x256xi32>
    %c2_i32_27 = arith.constant 2 : i32
    %56 = vector.broadcast %c2_i32_27 : i32 to vector<1x256xi32>
    %57 = arith.addi %6, %56 : vector<1x256xi32>
    %c16_i32_28 = arith.constant 16 : i32
    %58 = vector.broadcast %c16_i32_28 : i32 to vector<1x256xi32>
    %59 = arith.cmpi slt, %57, %58 : vector<1x256xi32>
    %60 = arith.andi %55, %59 : vector<1x256xi1>
    %61 = arith.extui %60 : vector<1x256xi1> to vector<1x256xi32>
    %62 = arith.sitofp %61 : vector<1x256xi32> to vector<1x256xf32>
    %c-2_i32_29 = arith.constant -2 : i32
    %63 = vector.broadcast %c-2_i32_29 : i32 to vector<1x256xi32>
    %64 = arith.addi %7, %63 : vector<1x256xi32>
    %c0_i32_30 = arith.constant 0 : i32
    %65 = vector.broadcast %c0_i32_30 : i32 to vector<1x256xi32>
    %66 = arith.cmpi sge, %64, %65 : vector<1x256xi32>
    %c-2_i32_31 = arith.constant -2 : i32
    %67 = vector.broadcast %c-2_i32_31 : i32 to vector<1x256xi32>
    %68 = arith.addi %7, %67 : vector<1x256xi32>
    %c16_i32_32 = arith.constant 16 : i32
    %69 = vector.broadcast %c16_i32_32 : i32 to vector<1x256xi32>
    %70 = arith.cmpi slt, %68, %69 : vector<1x256xi32>
    %71 = arith.andi %66, %70 : vector<1x256xi1>
    %72 = arith.extui %71 : vector<1x256xi1> to vector<1x256xi32>
    %73 = arith.sitofp %72 : vector<1x256xi32> to vector<1x256xf32>
    %c-1_i32_33 = arith.constant -1 : i32
    %74 = vector.broadcast %c-1_i32_33 : i32 to vector<1x256xi32>
    %75 = arith.addi %7, %74 : vector<1x256xi32>
    %c0_i32_34 = arith.constant 0 : i32
    %76 = vector.broadcast %c0_i32_34 : i32 to vector<1x256xi32>
    %77 = arith.cmpi sge, %75, %76 : vector<1x256xi32>
    %c-1_i32_35 = arith.constant -1 : i32
    %78 = vector.broadcast %c-1_i32_35 : i32 to vector<1x256xi32>
    %79 = arith.addi %7, %78 : vector<1x256xi32>
    %c16_i32_36 = arith.constant 16 : i32
    %80 = vector.broadcast %c16_i32_36 : i32 to vector<1x256xi32>
    %81 = arith.cmpi slt, %79, %80 : vector<1x256xi32>
    %82 = arith.andi %77, %81 : vector<1x256xi1>
    %83 = arith.extui %82 : vector<1x256xi1> to vector<1x256xi32>
    %84 = arith.sitofp %83 : vector<1x256xi32> to vector<1x256xf32>
    %c0_i32_37 = arith.constant 0 : i32
    %85 = vector.broadcast %c0_i32_37 : i32 to vector<1x256xi32>
    %86 = arith.addi %7, %85 : vector<1x256xi32>
    %c0_i32_38 = arith.constant 0 : i32
    %87 = vector.broadcast %c0_i32_38 : i32 to vector<1x256xi32>
    %88 = arith.cmpi sge, %86, %87 : vector<1x256xi32>
    %c0_i32_39 = arith.constant 0 : i32
    %89 = vector.broadcast %c0_i32_39 : i32 to vector<1x256xi32>
    %90 = arith.addi %7, %89 : vector<1x256xi32>
    %c16_i32_40 = arith.constant 16 : i32
    %91 = vector.broadcast %c16_i32_40 : i32 to vector<1x256xi32>
    %92 = arith.cmpi slt, %90, %91 : vector<1x256xi32>
    %93 = arith.andi %88, %92 : vector<1x256xi1>
    %94 = arith.extui %93 : vector<1x256xi1> to vector<1x256xi32>
    %95 = arith.sitofp %94 : vector<1x256xi32> to vector<1x256xf32>
    %c1_i32_41 = arith.constant 1 : i32
    %96 = vector.broadcast %c1_i32_41 : i32 to vector<1x256xi32>
    %97 = arith.addi %7, %96 : vector<1x256xi32>
    %c0_i32_42 = arith.constant 0 : i32
    %98 = vector.broadcast %c0_i32_42 : i32 to vector<1x256xi32>
    %99 = arith.cmpi sge, %97, %98 : vector<1x256xi32>
    %c1_i32_43 = arith.constant 1 : i32
    %100 = vector.broadcast %c1_i32_43 : i32 to vector<1x256xi32>
    %101 = arith.addi %7, %100 : vector<1x256xi32>
    %c16_i32_44 = arith.constant 16 : i32
    %102 = vector.broadcast %c16_i32_44 : i32 to vector<1x256xi32>
    %103 = arith.cmpi slt, %101, %102 : vector<1x256xi32>
    %104 = arith.andi %99, %103 : vector<1x256xi1>
    %105 = arith.extui %104 : vector<1x256xi1> to vector<1x256xi32>
    %106 = arith.sitofp %105 : vector<1x256xi32> to vector<1x256xf32>
    %c2_i32_45 = arith.constant 2 : i32
    %107 = vector.broadcast %c2_i32_45 : i32 to vector<1x256xi32>
    %108 = arith.addi %7, %107 : vector<1x256xi32>
    %c0_i32_46 = arith.constant 0 : i32
    %109 = vector.broadcast %c0_i32_46 : i32 to vector<1x256xi32>
    %110 = arith.cmpi sge, %108, %109 : vector<1x256xi32>
    %c2_i32_47 = arith.constant 2 : i32
    %111 = vector.broadcast %c2_i32_47 : i32 to vector<1x256xi32>
    %112 = arith.addi %7, %111 : vector<1x256xi32>
    %c16_i32_48 = arith.constant 16 : i32
    %113 = vector.broadcast %c16_i32_48 : i32 to vector<1x256xi32>
    %114 = arith.cmpi slt, %112, %113 : vector<1x256xi32>
    %115 = arith.andi %110, %114 : vector<1x256xi1>
    %116 = arith.extui %115 : vector<1x256xi1> to vector<1x256xi32>
    %117 = arith.sitofp %116 : vector<1x256xi32> to vector<1x256xf32>
    %118 = vector.extract_strided_slice %2 {offsets = [0, 0], sizes = [4, 1], strides = [1, 1]} : vector<4x25xf32> to vector<4x1xf32>
    %119 = vector.extract_strided_slice %2 {offsets = [0, 1], sizes = [4, 1], strides = [1, 1]} : vector<4x25xf32> to vector<4x1xf32>
    %120 = vector.extract_strided_slice %2 {offsets = [0, 2], sizes = [4, 1], strides = [1, 1]} : vector<4x25xf32> to vector<4x1xf32>
    %121 = vector.extract_strided_slice %2 {offsets = [0, 3], sizes = [4, 1], strides = [1, 1]} : vector<4x25xf32> to vector<4x1xf32>
    %122 = vector.extract_strided_slice %2 {offsets = [0, 4], sizes = [4, 1], strides = [1, 1]} : vector<4x25xf32> to vector<4x1xf32>
    %123 = vector.extract_strided_slice %2 {offsets = [0, 5], sizes = [4, 1], strides = [1, 1]} : vector<4x25xf32> to vector<4x1xf32>
    %124 = vector.extract_strided_slice %2 {offsets = [0, 6], sizes = [4, 1], strides = [1, 1]} : vector<4x25xf32> to vector<4x1xf32>
    %125 = vector.extract_strided_slice %2 {offsets = [0, 7], sizes = [4, 1], strides = [1, 1]} : vector<4x25xf32> to vector<4x1xf32>
    %126 = vector.extract_strided_slice %2 {offsets = [0, 8], sizes = [4, 1], strides = [1, 1]} : vector<4x25xf32> to vector<4x1xf32>
    %127 = vector.extract_strided_slice %2 {offsets = [0, 9], sizes = [4, 1], strides = [1, 1]} : vector<4x25xf32> to vector<4x1xf32>
    %128 = vector.extract_strided_slice %2 {offsets = [0, 10], sizes = [4, 1], strides = [1, 1]} : vector<4x25xf32> to vector<4x1xf32>
    %129 = vector.extract_strided_slice %2 {offsets = [0, 11], sizes = [4, 1], strides = [1, 1]} : vector<4x25xf32> to vector<4x1xf32>
    %130 = vector.extract_strided_slice %2 {offsets = [0, 12], sizes = [4, 1], strides = [1, 1]} : vector<4x25xf32> to vector<4x1xf32>
    %131 = vector.extract_strided_slice %2 {offsets = [0, 13], sizes = [4, 1], strides = [1, 1]} : vector<4x25xf32> to vector<4x1xf32>
    %132 = vector.extract_strided_slice %2 {offsets = [0, 14], sizes = [4, 1], strides = [1, 1]} : vector<4x25xf32> to vector<4x1xf32>
    %133 = vector.extract_strided_slice %2 {offsets = [0, 15], sizes = [4, 1], strides = [1, 1]} : vector<4x25xf32> to vector<4x1xf32>
    %134 = vector.extract_strided_slice %2 {offsets = [0, 16], sizes = [4, 1], strides = [1, 1]} : vector<4x25xf32> to vector<4x1xf32>
    %135 = vector.extract_strided_slice %2 {offsets = [0, 17], sizes = [4, 1], strides = [1, 1]} : vector<4x25xf32> to vector<4x1xf32>
    %136 = vector.extract_strided_slice %2 {offsets = [0, 18], sizes = [4, 1], strides = [1, 1]} : vector<4x25xf32> to vector<4x1xf32>
    %137 = vector.extract_strided_slice %2 {offsets = [0, 19], sizes = [4, 1], strides = [1, 1]} : vector<4x25xf32> to vector<4x1xf32>
    %138 = vector.extract_strided_slice %2 {offsets = [0, 20], sizes = [4, 1], strides = [1, 1]} : vector<4x25xf32> to vector<4x1xf32>
    %139 = vector.extract_strided_slice %2 {offsets = [0, 21], sizes = [4, 1], strides = [1, 1]} : vector<4x25xf32> to vector<4x1xf32>
    %140 = vector.extract_strided_slice %2 {offsets = [0, 22], sizes = [4, 1], strides = [1, 1]} : vector<4x25xf32> to vector<4x1xf32>
    %141 = vector.extract_strided_slice %2 {offsets = [0, 23], sizes = [4, 1], strides = [1, 1]} : vector<4x25xf32> to vector<4x1xf32>
    %142 = vector.extract_strided_slice %2 {offsets = [0, 24], sizes = [4, 1], strides = [1, 1]} : vector<4x25xf32> to vector<4x1xf32>
    %c0_49 = arith.constant 0 : index
    %c0_50 = arith.constant 0 : index
    %c0_51 = arith.constant 0 : index
    %143 = vector.load %arg1[%c0_49, %c0_50, %c0_51] : memref<1x8x256xf32, #tpu.memory_space<vmem>>, vector<1x8x256xf32>
    %144 = vector.shape_cast %143 : vector<1x8x256xf32> to vector<8x256xf32>
    %145 = vector.extract_strided_slice %144 {offsets = [0, 0], sizes = [4, 256], strides = [1, 1]} : vector<8x256xf32> to vector<4x256xf32>
    %146 = vector.extract_strided_slice %144 {offsets = [4, 0], sizes = [4, 256], strides = [1, 1]} : vector<8x256xf32> to vector<4x256xf32>
    %147 = vector.extract_strided_slice %0 {offsets = [0, 0], sizes = [4, 1], strides = [1, 1]} : vector<4x4xf32> to vector<4x1xf32>
    %148 = vector.extract_strided_slice %146 {offsets = [0, 0], sizes = [1, 256], strides = [1, 1]} : vector<4x256xf32> to vector<1x256xf32>
    %149 = vector.broadcast %147 : vector<4x1xf32> to vector<4x256xf32>
    %150 = vector.broadcast %148 : vector<1x256xf32> to vector<4x256xf32>
    %151 = arith.mulf %149, %150 : vector<4x256xf32>
    %152 = vector.extract_strided_slice %0 {offsets = [0, 1], sizes = [4, 1], strides = [1, 1]} : vector<4x4xf32> to vector<4x1xf32>
    %153 = vector.extract_strided_slice %146 {offsets = [1, 0], sizes = [1, 256], strides = [1, 1]} : vector<4x256xf32> to vector<1x256xf32>
    %154 = vector.broadcast %152 : vector<4x1xf32> to vector<4x256xf32>
    %155 = vector.broadcast %153 : vector<1x256xf32> to vector<4x256xf32>
    %156 = arith.mulf %154, %155 : vector<4x256xf32>
    %157 = arith.addf %151, %156 : vector<4x256xf32>
    %158 = vector.extract_strided_slice %0 {offsets = [0, 2], sizes = [4, 1], strides = [1, 1]} : vector<4x4xf32> to vector<4x1xf32>
    %159 = vector.extract_strided_slice %146 {offsets = [2, 0], sizes = [1, 256], strides = [1, 1]} : vector<4x256xf32> to vector<1x256xf32>
    %160 = vector.broadcast %158 : vector<4x1xf32> to vector<4x256xf32>
    %161 = vector.broadcast %159 : vector<1x256xf32> to vector<4x256xf32>
    %162 = arith.mulf %160, %161 : vector<4x256xf32>
    %163 = arith.addf %157, %162 : vector<4x256xf32>
    %164 = vector.extract_strided_slice %0 {offsets = [0, 3], sizes = [4, 1], strides = [1, 1]} : vector<4x4xf32> to vector<4x1xf32>
    %165 = vector.extract_strided_slice %146 {offsets = [3, 0], sizes = [1, 256], strides = [1, 1]} : vector<4x256xf32> to vector<1x256xf32>
    %166 = vector.broadcast %164 : vector<4x1xf32> to vector<4x256xf32>
    %167 = vector.broadcast %165 : vector<1x256xf32> to vector<4x256xf32>
    %168 = arith.mulf %166, %167 : vector<4x256xf32>
    %169 = arith.addf %163, %168 : vector<4x256xf32>
    %170 = vector.broadcast %1 : vector<4x1xf32> to vector<4x256xf32>
    %171 = arith.addf %169, %170 : vector<4x256xf32>
    %cst = arith.constant 0.000000e+00 : f32
    %172 = vector.broadcast %cst : f32 to vector<4x256xf32>
    %173 = arith.maximumf %171, %172 : vector<4x256xf32>
    %cst_52 = arith.constant 0.000000e+00 : f32
    %174 = vector.broadcast %cst_52 : f32 to vector<4x256xf32>
    %c34_i32 = arith.constant 34 : i32
    %175 = tpu.dynamic_rotate %173 by %c34_i32 dim 1 : vector<4x256xf32>, i32 -> vector<4x256xf32>
    %176 = vector.broadcast %118 : vector<4x1xf32> to vector<4x256xf32>
    %177 = arith.mulf %175, %176 : vector<4x256xf32>
    %178 = arith.mulf %18, %73 : vector<1x256xf32>
    %179 = vector.broadcast %178 : vector<1x256xf32> to vector<4x256xf32>
    %180 = arith.mulf %177, %179 : vector<4x256xf32>
    %181 = arith.addf %174, %180 : vector<4x256xf32>
    %c33_i32 = arith.constant 33 : i32
    %182 = tpu.dynamic_rotate %173 by %c33_i32 dim 1 : vector<4x256xf32>, i32 -> vector<4x256xf32>
    %183 = vector.broadcast %119 : vector<4x1xf32> to vector<4x256xf32>
    %184 = arith.mulf %182, %183 : vector<4x256xf32>
    %185 = arith.mulf %18, %84 : vector<1x256xf32>
    %186 = vector.broadcast %185 : vector<1x256xf32> to vector<4x256xf32>
    %187 = arith.mulf %184, %186 : vector<4x256xf32>
    %188 = arith.addf %181, %187 : vector<4x256xf32>
    %c32_i32 = arith.constant 32 : i32
    %189 = tpu.dynamic_rotate %173 by %c32_i32 dim 1 : vector<4x256xf32>, i32 -> vector<4x256xf32>
    %190 = vector.broadcast %120 : vector<4x1xf32> to vector<4x256xf32>
    %191 = arith.mulf %189, %190 : vector<4x256xf32>
    %192 = arith.mulf %18, %95 : vector<1x256xf32>
    %193 = vector.broadcast %192 : vector<1x256xf32> to vector<4x256xf32>
    %194 = arith.mulf %191, %193 : vector<4x256xf32>
    %195 = arith.addf %188, %194 : vector<4x256xf32>
    %c31_i32 = arith.constant 31 : i32
    %196 = tpu.dynamic_rotate %173 by %c31_i32 dim 1 : vector<4x256xf32>, i32 -> vector<4x256xf32>
    %197 = vector.broadcast %121 : vector<4x1xf32> to vector<4x256xf32>
    %198 = arith.mulf %196, %197 : vector<4x256xf32>
    %199 = arith.mulf %18, %106 : vector<1x256xf32>
    %200 = vector.broadcast %199 : vector<1x256xf32> to vector<4x256xf32>
    %201 = arith.mulf %198, %200 : vector<4x256xf32>
    %202 = arith.addf %195, %201 : vector<4x256xf32>
    %c30_i32 = arith.constant 30 : i32
    %203 = tpu.dynamic_rotate %173 by %c30_i32 dim 1 : vector<4x256xf32>, i32 -> vector<4x256xf32>
    %204 = vector.broadcast %122 : vector<4x1xf32> to vector<4x256xf32>
    %205 = arith.mulf %203, %204 : vector<4x256xf32>
    %206 = arith.mulf %18, %117 : vector<1x256xf32>
    %207 = vector.broadcast %206 : vector<1x256xf32> to vector<4x256xf32>
    %208 = arith.mulf %205, %207 : vector<4x256xf32>
    %209 = arith.addf %202, %208 : vector<4x256xf32>
    %c18_i32 = arith.constant 18 : i32
    %210 = tpu.dynamic_rotate %173 by %c18_i32 dim 1 : vector<4x256xf32>, i32 -> vector<4x256xf32>
    %211 = vector.broadcast %123 : vector<4x1xf32> to vector<4x256xf32>
    %212 = arith.mulf %210, %211 : vector<4x256xf32>
    %213 = arith.mulf %29, %73 : vector<1x256xf32>
    %214 = vector.broadcast %213 : vector<1x256xf32> to vector<4x256xf32>
    %215 = arith.mulf %212, %214 : vector<4x256xf32>
    %216 = arith.addf %209, %215 : vector<4x256xf32>
    %c17_i32 = arith.constant 17 : i32
    %217 = tpu.dynamic_rotate %173 by %c17_i32 dim 1 : vector<4x256xf32>, i32 -> vector<4x256xf32>
    %218 = vector.broadcast %124 : vector<4x1xf32> to vector<4x256xf32>
    %219 = arith.mulf %217, %218 : vector<4x256xf32>
    %220 = arith.mulf %29, %84 : vector<1x256xf32>
    %221 = vector.broadcast %220 : vector<1x256xf32> to vector<4x256xf32>
    %222 = arith.mulf %219, %221 : vector<4x256xf32>
    %223 = arith.addf %216, %222 : vector<4x256xf32>
    %c16_i32_53 = arith.constant 16 : i32
    %224 = tpu.dynamic_rotate %173 by %c16_i32_53 dim 1 : vector<4x256xf32>, i32 -> vector<4x256xf32>
    %225 = vector.broadcast %125 : vector<4x1xf32> to vector<4x256xf32>
    %226 = arith.mulf %224, %225 : vector<4x256xf32>
    %227 = arith.mulf %29, %95 : vector<1x256xf32>
    %228 = vector.broadcast %227 : vector<1x256xf32> to vector<4x256xf32>
    %229 = arith.mulf %226, %228 : vector<4x256xf32>
    %230 = arith.addf %223, %229 : vector<4x256xf32>
    %c15_i32 = arith.constant 15 : i32
    %231 = tpu.dynamic_rotate %173 by %c15_i32 dim 1 : vector<4x256xf32>, i32 -> vector<4x256xf32>
    %232 = vector.broadcast %126 : vector<4x1xf32> to vector<4x256xf32>
    %233 = arith.mulf %231, %232 : vector<4x256xf32>
    %234 = arith.mulf %29, %106 : vector<1x256xf32>
    %235 = vector.broadcast %234 : vector<1x256xf32> to vector<4x256xf32>
    %236 = arith.mulf %233, %235 : vector<4x256xf32>
    %237 = arith.addf %230, %236 : vector<4x256xf32>
    %c14_i32 = arith.constant 14 : i32
    %238 = tpu.dynamic_rotate %173 by %c14_i32 dim 1 : vector<4x256xf32>, i32 -> vector<4x256xf32>
    %239 = vector.broadcast %127 : vector<4x1xf32> to vector<4x256xf32>
    %240 = arith.mulf %238, %239 : vector<4x256xf32>
    %241 = arith.mulf %29, %117 : vector<1x256xf32>
    %242 = vector.broadcast %241 : vector<1x256xf32> to vector<4x256xf32>
    %243 = arith.mulf %240, %242 : vector<4x256xf32>
    %244 = arith.addf %237, %243 : vector<4x256xf32>
    %c2_i32_54 = arith.constant 2 : i32
    %245 = tpu.dynamic_rotate %173 by %c2_i32_54 dim 1 : vector<4x256xf32>, i32 -> vector<4x256xf32>
    %246 = vector.broadcast %128 : vector<4x1xf32> to vector<4x256xf32>
    %247 = arith.mulf %245, %246 : vector<4x256xf32>
    %248 = arith.mulf %40, %73 : vector<1x256xf32>
    %249 = vector.broadcast %248 : vector<1x256xf32> to vector<4x256xf32>
    %250 = arith.mulf %247, %249 : vector<4x256xf32>
    %251 = arith.addf %244, %250 : vector<4x256xf32>
    %c1_i32_55 = arith.constant 1 : i32
    %252 = tpu.dynamic_rotate %173 by %c1_i32_55 dim 1 : vector<4x256xf32>, i32 -> vector<4x256xf32>
    %253 = vector.broadcast %129 : vector<4x1xf32> to vector<4x256xf32>
    %254 = arith.mulf %252, %253 : vector<4x256xf32>
    %255 = arith.mulf %40, %84 : vector<1x256xf32>
    %256 = vector.broadcast %255 : vector<1x256xf32> to vector<4x256xf32>
    %257 = arith.mulf %254, %256 : vector<4x256xf32>
    %258 = arith.addf %251, %257 : vector<4x256xf32>
    %259 = vector.broadcast %130 : vector<4x1xf32> to vector<4x256xf32>
    %260 = arith.mulf %173, %259 : vector<4x256xf32>
    %261 = arith.mulf %40, %95 : vector<1x256xf32>
    %262 = vector.broadcast %261 : vector<1x256xf32> to vector<4x256xf32>
    %263 = arith.mulf %260, %262 : vector<4x256xf32>
    %264 = arith.addf %258, %263 : vector<4x256xf32>
    %c255_i32 = arith.constant 255 : i32
    %265 = tpu.dynamic_rotate %173 by %c255_i32 dim 1 : vector<4x256xf32>, i32 -> vector<4x256xf32>
    %266 = vector.broadcast %131 : vector<4x1xf32> to vector<4x256xf32>
    %267 = arith.mulf %265, %266 : vector<4x256xf32>
    %268 = arith.mulf %40, %106 : vector<1x256xf32>
    %269 = vector.broadcast %268 : vector<1x256xf32> to vector<4x256xf32>
    %270 = arith.mulf %267, %269 : vector<4x256xf32>
    %271 = arith.addf %264, %270 : vector<4x256xf32>
    %c254_i32 = arith.constant 254 : i32
    %272 = tpu.dynamic_rotate %173 by %c254_i32 dim 1 : vector<4x256xf32>, i32 -> vector<4x256xf32>
    %273 = vector.broadcast %132 : vector<4x1xf32> to vector<4x256xf32>
    %274 = arith.mulf %272, %273 : vector<4x256xf32>
    %275 = arith.mulf %40, %117 : vector<1x256xf32>
    %276 = vector.broadcast %275 : vector<1x256xf32> to vector<4x256xf32>
    %277 = arith.mulf %274, %276 : vector<4x256xf32>
    %278 = arith.addf %271, %277 : vector<4x256xf32>
    %c242_i32 = arith.constant 242 : i32
    %279 = tpu.dynamic_rotate %173 by %c242_i32 dim 1 : vector<4x256xf32>, i32 -> vector<4x256xf32>
    %280 = vector.broadcast %133 : vector<4x1xf32> to vector<4x256xf32>
    %281 = arith.mulf %279, %280 : vector<4x256xf32>
    %282 = arith.mulf %51, %73 : vector<1x256xf32>
    %283 = vector.broadcast %282 : vector<1x256xf32> to vector<4x256xf32>
    %284 = arith.mulf %281, %283 : vector<4x256xf32>
    %285 = arith.addf %278, %284 : vector<4x256xf32>
    %c241_i32 = arith.constant 241 : i32
    %286 = tpu.dynamic_rotate %173 by %c241_i32 dim 1 : vector<4x256xf32>, i32 -> vector<4x256xf32>
    %287 = vector.broadcast %134 : vector<4x1xf32> to vector<4x256xf32>
    %288 = arith.mulf %286, %287 : vector<4x256xf32>
    %289 = arith.mulf %51, %84 : vector<1x256xf32>
    %290 = vector.broadcast %289 : vector<1x256xf32> to vector<4x256xf32>
    %291 = arith.mulf %288, %290 : vector<4x256xf32>
    %292 = arith.addf %285, %291 : vector<4x256xf32>
    %c240_i32 = arith.constant 240 : i32
    %293 = tpu.dynamic_rotate %173 by %c240_i32 dim 1 : vector<4x256xf32>, i32 -> vector<4x256xf32>
    %294 = vector.broadcast %135 : vector<4x1xf32> to vector<4x256xf32>
    %295 = arith.mulf %293, %294 : vector<4x256xf32>
    %296 = arith.mulf %51, %95 : vector<1x256xf32>
    %297 = vector.broadcast %296 : vector<1x256xf32> to vector<4x256xf32>
    %298 = arith.mulf %295, %297 : vector<4x256xf32>
    %299 = arith.addf %292, %298 : vector<4x256xf32>
    %c239_i32 = arith.constant 239 : i32
    %300 = tpu.dynamic_rotate %173 by %c239_i32 dim 1 : vector<4x256xf32>, i32 -> vector<4x256xf32>
    %301 = vector.broadcast %136 : vector<4x1xf32> to vector<4x256xf32>
    %302 = arith.mulf %300, %301 : vector<4x256xf32>
    %303 = arith.mulf %51, %106 : vector<1x256xf32>
    %304 = vector.broadcast %303 : vector<1x256xf32> to vector<4x256xf32>
    %305 = arith.mulf %302, %304 : vector<4x256xf32>
    %306 = arith.addf %299, %305 : vector<4x256xf32>
    %c238_i32 = arith.constant 238 : i32
    %307 = tpu.dynamic_rotate %173 by %c238_i32 dim 1 : vector<4x256xf32>, i32 -> vector<4x256xf32>
    %308 = vector.broadcast %137 : vector<4x1xf32> to vector<4x256xf32>
    %309 = arith.mulf %307, %308 : vector<4x256xf32>
    %310 = arith.mulf %51, %117 : vector<1x256xf32>
    %311 = vector.broadcast %310 : vector<1x256xf32> to vector<4x256xf32>
    %312 = arith.mulf %309, %311 : vector<4x256xf32>
    %313 = arith.addf %306, %312 : vector<4x256xf32>
    %c226_i32 = arith.constant 226 : i32
    %314 = tpu.dynamic_rotate %173 by %c226_i32 dim 1 : vector<4x256xf32>, i32 -> vector<4x256xf32>
    %315 = vector.broadcast %138 : vector<4x1xf32> to vector<4x256xf32>
    %316 = arith.mulf %314, %315 : vector<4x256xf32>
    %317 = arith.mulf %62, %73 : vector<1x256xf32>
    %318 = vector.broadcast %317 : vector<1x256xf32> to vector<4x256xf32>
    %319 = arith.mulf %316, %318 : vector<4x256xf32>
    %320 = arith.addf %313, %319 : vector<4x256xf32>
    %c225_i32 = arith.constant 225 : i32
    %321 = tpu.dynamic_rotate %173 by %c225_i32 dim 1 : vector<4x256xf32>, i32 -> vector<4x256xf32>
    %322 = vector.broadcast %139 : vector<4x1xf32> to vector<4x256xf32>
    %323 = arith.mulf %321, %322 : vector<4x256xf32>
    %324 = arith.mulf %62, %84 : vector<1x256xf32>
    %325 = vector.broadcast %324 : vector<1x256xf32> to vector<4x256xf32>
    %326 = arith.mulf %323, %325 : vector<4x256xf32>
    %327 = arith.addf %320, %326 : vector<4x256xf32>
    %c224_i32 = arith.constant 224 : i32
    %328 = tpu.dynamic_rotate %173 by %c224_i32 dim 1 : vector<4x256xf32>, i32 -> vector<4x256xf32>
    %329 = vector.broadcast %140 : vector<4x1xf32> to vector<4x256xf32>
    %330 = arith.mulf %328, %329 : vector<4x256xf32>
    %331 = arith.mulf %62, %95 : vector<1x256xf32>
    %332 = vector.broadcast %331 : vector<1x256xf32> to vector<4x256xf32>
    %333 = arith.mulf %330, %332 : vector<4x256xf32>
    %334 = arith.addf %327, %333 : vector<4x256xf32>
    %c223_i32 = arith.constant 223 : i32
    %335 = tpu.dynamic_rotate %173 by %c223_i32 dim 1 : vector<4x256xf32>, i32 -> vector<4x256xf32>
    %336 = vector.broadcast %141 : vector<4x1xf32> to vector<4x256xf32>
    %337 = arith.mulf %335, %336 : vector<4x256xf32>
    %338 = arith.mulf %62, %106 : vector<1x256xf32>
    %339 = vector.broadcast %338 : vector<1x256xf32> to vector<4x256xf32>
    %340 = arith.mulf %337, %339 : vector<4x256xf32>
    %341 = arith.addf %334, %340 : vector<4x256xf32>
    %c222_i32 = arith.constant 222 : i32
    %342 = tpu.dynamic_rotate %173 by %c222_i32 dim 1 : vector<4x256xf32>, i32 -> vector<4x256xf32>
    %343 = vector.broadcast %142 : vector<4x1xf32> to vector<4x256xf32>
    %344 = arith.mulf %342, %343 : vector<4x256xf32>
    %345 = arith.mulf %62, %117 : vector<1x256xf32>
    %346 = vector.broadcast %345 : vector<1x256xf32> to vector<4x256xf32>
    %347 = arith.mulf %344, %346 : vector<4x256xf32>
    %348 = arith.addf %341, %347 : vector<4x256xf32>
    %349 = vector.broadcast %3 : vector<4x1xf32> to vector<4x256xf32>
    %350 = arith.addf %348, %349 : vector<4x256xf32>
    %351 = vector.extract_strided_slice %4 {offsets = [0, 0], sizes = [4, 1], strides = [1, 1]} : vector<4x4xf32> to vector<4x1xf32>
    %352 = vector.extract_strided_slice %350 {offsets = [0, 0], sizes = [1, 256], strides = [1, 1]} : vector<4x256xf32> to vector<1x256xf32>
    %353 = vector.broadcast %351 : vector<4x1xf32> to vector<4x256xf32>
    %354 = vector.broadcast %352 : vector<1x256xf32> to vector<4x256xf32>
    %355 = arith.mulf %353, %354 : vector<4x256xf32>
    %356 = vector.extract_strided_slice %4 {offsets = [0, 1], sizes = [4, 1], strides = [1, 1]} : vector<4x4xf32> to vector<4x1xf32>
    %357 = vector.extract_strided_slice %350 {offsets = [1, 0], sizes = [1, 256], strides = [1, 1]} : vector<4x256xf32> to vector<1x256xf32>
    %358 = vector.broadcast %356 : vector<4x1xf32> to vector<4x256xf32>
    %359 = vector.broadcast %357 : vector<1x256xf32> to vector<4x256xf32>
    %360 = arith.mulf %358, %359 : vector<4x256xf32>
    %361 = arith.addf %355, %360 : vector<4x256xf32>
    %362 = vector.extract_strided_slice %4 {offsets = [0, 2], sizes = [4, 1], strides = [1, 1]} : vector<4x4xf32> to vector<4x1xf32>
    %363 = vector.extract_strided_slice %350 {offsets = [2, 0], sizes = [1, 256], strides = [1, 1]} : vector<4x256xf32> to vector<1x256xf32>
    %364 = vector.broadcast %362 : vector<4x1xf32> to vector<4x256xf32>
    %365 = vector.broadcast %363 : vector<1x256xf32> to vector<4x256xf32>
    %366 = arith.mulf %364, %365 : vector<4x256xf32>
    %367 = arith.addf %361, %366 : vector<4x256xf32>
    %368 = vector.extract_strided_slice %4 {offsets = [0, 3], sizes = [4, 1], strides = [1, 1]} : vector<4x4xf32> to vector<4x1xf32>
    %369 = vector.extract_strided_slice %350 {offsets = [3, 0], sizes = [1, 256], strides = [1, 1]} : vector<4x256xf32> to vector<1x256xf32>
    %370 = vector.broadcast %368 : vector<4x1xf32> to vector<4x256xf32>
    %371 = vector.broadcast %369 : vector<1x256xf32> to vector<4x256xf32>
    %372 = arith.mulf %370, %371 : vector<4x256xf32>
    %373 = arith.addf %367, %372 : vector<4x256xf32>
    %374 = vector.broadcast %5 : vector<4x1xf32> to vector<4x256xf32>
    %375 = arith.addf %373, %374 : vector<4x256xf32>
    %cst_56 = arith.constant 0.000000e+00 : f32
    %376 = vector.broadcast %cst_56 : f32 to vector<4x256xf32>
    %377 = arith.maximumf %375, %376 : vector<4x256xf32>
    %378 = vector.extract_strided_slice %145 {offsets = [0, 0], sizes = [1, 256], strides = [1, 1]} : vector<4x256xf32> to vector<1x256xf32>
    %c0_57 = arith.constant 0 : index
    %c0_58 = arith.constant 0 : index
    %c0_59 = arith.constant 0 : index
    %379 = vector.load %arg10[%c0_57, %c0_58, %c0_59] : memref<1x8x256xf32, #tpu.memory_space<vmem>>, vector<1x1x256xf32>
    %380 = vector.shape_cast %379 : vector<1x1x256xf32> to vector<1x256xf32>
    %381 = vector.shape_cast %378 : vector<1x256xf32> to vector<1x1x256xf32>
    tpu.vector_store %arg10[%c0_57, %c0_58, %c0_59], %381 {strides = array<i32>} : memref<1x8x256xf32, #tpu.memory_space<vmem>>, vector<1x1x256xf32>,
    %382 = vector.extract_strided_slice %377 {offsets = [0, 0], sizes = [1, 256], strides = [1, 1]} : vector<4x256xf32> to vector<1x256xf32>
    %c0_60 = arith.constant 0 : index
    %c1 = arith.constant 1 : index
    %c0_61 = arith.constant 0 : index
    %383 = vector.load %arg10[%c0_60, %c1, %c0_61] : memref<1x8x256xf32, #tpu.memory_space<vmem>>, vector<1x1x256xf32>
    %384 = vector.shape_cast %383 : vector<1x1x256xf32> to vector<1x256xf32>
    %385 = vector.shape_cast %382 : vector<1x256xf32> to vector<1x1x256xf32>
    tpu.vector_store %arg10[%c0_60, %c1, %c0_61], %385 {strides = array<i32>} : memref<1x8x256xf32, #tpu.memory_space<vmem>>, vector<1x1x256xf32>,
    %386 = vector.extract_strided_slice %145 {offsets = [1, 0], sizes = [1, 256], strides = [1, 1]} : vector<4x256xf32> to vector<1x256xf32>
    %c0_62 = arith.constant 0 : index
    %c2 = arith.constant 2 : index
    %c0_63 = arith.constant 0 : index
    %387 = vector.load %arg10[%c0_62, %c2, %c0_63] : memref<1x8x256xf32, #tpu.memory_space<vmem>>, vector<1x1x256xf32>
    %388 = vector.shape_cast %387 : vector<1x1x256xf32> to vector<1x256xf32>
    %389 = vector.shape_cast %386 : vector<1x256xf32> to vector<1x1x256xf32>
    tpu.vector_store %arg10[%c0_62, %c2, %c0_63], %389 {strides = array<i32>} : memref<1x8x256xf32, #tpu.memory_space<vmem>>, vector<1x1x256xf32>,
    %390 = vector.extract_strided_slice %377 {offsets = [1, 0], sizes = [1, 256], strides = [1, 1]} : vector<4x256xf32> to vector<1x256xf32>
    %c0_64 = arith.constant 0 : index
    %c3 = arith.constant 3 : index
    %c0_65 = arith.constant 0 : index
    %391 = vector.load %arg10[%c0_64, %c3, %c0_65] : memref<1x8x256xf32, #tpu.memory_space<vmem>>, vector<1x1x256xf32>
    %392 = vector.shape_cast %391 : vector<1x1x256xf32> to vector<1x256xf32>
    %393 = vector.shape_cast %390 : vector<1x256xf32> to vector<1x1x256xf32>
    tpu.vector_store %arg10[%c0_64, %c3, %c0_65], %393 {strides = array<i32>} : memref<1x8x256xf32, #tpu.memory_space<vmem>>, vector<1x1x256xf32>,
    %394 = vector.extract_strided_slice %145 {offsets = [2, 0], sizes = [1, 256], strides = [1, 1]} : vector<4x256xf32> to vector<1x256xf32>
    %c0_66 = arith.constant 0 : index
    %c4 = arith.constant 4 : index
    %c0_67 = arith.constant 0 : index
    %395 = vector.load %arg10[%c0_66, %c4, %c0_67] : memref<1x8x256xf32, #tpu.memory_space<vmem>>, vector<1x1x256xf32>
    %396 = vector.shape_cast %395 : vector<1x1x256xf32> to vector<1x256xf32>
    %397 = vector.shape_cast %394 : vector<1x256xf32> to vector<1x1x256xf32>
    tpu.vector_store %arg10[%c0_66, %c4, %c0_67], %397 {strides = array<i32>} : memref<1x8x256xf32, #tpu.memory_space<vmem>>, vector<1x1x256xf32>,
    %398 = vector.extract_strided_slice %377 {offsets = [2, 0], sizes = [1, 256], strides = [1, 1]} : vector<4x256xf32> to vector<1x256xf32>
    %c0_68 = arith.constant 0 : index
    %c5 = arith.constant 5 : index
    %c0_69 = arith.constant 0 : index
    %399 = vector.load %arg10[%c0_68, %c5, %c0_69] : memref<1x8x256xf32, #tpu.memory_space<vmem>>, vector<1x1x256xf32>
    %400 = vector.shape_cast %399 : vector<1x1x256xf32> to vector<1x256xf32>
    %401 = vector.shape_cast %398 : vector<1x256xf32> to vector<1x1x256xf32>
    tpu.vector_store %arg10[%c0_68, %c5, %c0_69], %401 {strides = array<i32>} : memref<1x8x256xf32, #tpu.memory_space<vmem>>, vector<1x1x256xf32>,
    %402 = vector.extract_strided_slice %145 {offsets = [3, 0], sizes = [1, 256], strides = [1, 1]} : vector<4x256xf32> to vector<1x256xf32>
    %c0_70 = arith.constant 0 : index
    %c6 = arith.constant 6 : index
    %c0_71 = arith.constant 0 : index
    %403 = vector.load %arg10[%c0_70, %c6, %c0_71] : memref<1x8x256xf32, #tpu.memory_space<vmem>>, vector<1x1x256xf32>
    %404 = vector.shape_cast %403 : vector<1x1x256xf32> to vector<1x256xf32>
    %405 = vector.shape_cast %402 : vector<1x256xf32> to vector<1x1x256xf32>
    tpu.vector_store %arg10[%c0_70, %c6, %c0_71], %405 {strides = array<i32>} : memref<1x8x256xf32, #tpu.memory_space<vmem>>, vector<1x1x256xf32>,
    %406 = vector.extract_strided_slice %377 {offsets = [3, 0], sizes = [1, 256], strides = [1, 1]} : vector<4x256xf32> to vector<1x256xf32>
    %c0_72 = arith.constant 0 : index
    %c7 = arith.constant 7 : index
    %c0_73 = arith.constant 0 : index
    %407 = vector.load %arg10[%c0_72, %c7, %c0_73] : memref<1x8x256xf32, #tpu.memory_space<vmem>>, vector<1x1x256xf32>
    %408 = vector.shape_cast %407 : vector<1x1x256xf32> to vector<1x256xf32>
    %409 = vector.shape_cast %406 : vector<1x256xf32> to vector<1x1x256xf32>
    tpu.vector_store %arg10[%c0_72, %c7, %c0_73], %409 {strides = array<i32>} : memref<1x8x256xf32, #tpu.memory_space<vmem>>, vector<1x1x256xf32>,
    return
  }
  func.func @transform_0(%arg0: i32) -> (i32, i32, i32) {
    %c0_i32 = arith.constant 0 : i32
    %c0_i32_0 = arith.constant 0 : i32
    %c0_i32_1 = arith.constant 0 : i32
    return %arg0, %c0_i32, %c0_i32_0 : i32, i32, i32
  }
  func.func @transform_1(%arg0: i32) -> (i32, i32) {
    %c0_i32 = arith.constant 0 : i32
    %c0_i32_0 = arith.constant 0 : i32
    %c0_i32_1 = arith.constant 0 : i32
    return %c0_i32, %c0_i32_0 : i32, i32
  }
  func.func @transform_2(%arg0: i32) -> (i32, i32) {
    %c0_i32 = arith.constant 0 : i32
    %c0_i32_0 = arith.constant 0 : i32
    %c0_i32_1 = arith.constant 0 : i32
    return %c0_i32, %c0_i32_0 : i32, i32
  }
  func.func @transform_3(%arg0: i32) -> (i32, i32) {
    %c0_i32 = arith.constant 0 : i32
    %c0_i32_0 = arith.constant 0 : i32
    %c0_i32_1 = arith.constant 0 : i32
    return %c0_i32, %c0_i32_0 : i32, i32
  }
  func.func @transform_4(%arg0: i32) -> (i32, i32) {
    %c0_i32 = arith.constant 0 : i32
    %c0_i32_0 = arith.constant 0 : i32
    %c0_i32_1 = arith.constant 0 : i32
    return %c0_i32, %c0_i32_0 : i32, i32
  }
  func.func @transform_5(%arg0: i32) -> (i32, i32) {
    %c0_i32 = arith.constant 0 : i32
    %c0_i32_0 = arith.constant 0 : i32
    %c0_i32_1 = arith.constant 0 : i32
    return %c0_i32, %c0_i32_0 : i32, i32
  }
  func.func @transform_6(%arg0: i32) -> (i32, i32) {
    %c0_i32 = arith.constant 0 : i32
    %c0_i32_0 = arith.constant 0 : i32
    %c0_i32_1 = arith.constant 0 : i32
    return %c0_i32, %c0_i32_0 : i32, i32
  }
  func.func @transform_7(%arg0: i32) -> (i32, i32) {
    %c0_i32 = arith.constant 0 : i32
    %c0_i32_0 = arith.constant 0 : i32
    %c0_i32_1 = arith.constant 0 : i32
    return %c0_i32, %c0_i32_0 : i32, i32
  }
  func.func @transform_8(%arg0: i32) -> (i32, i32) {
    %c0_i32 = arith.constant 0 : i32
    %c0_i32_0 = arith.constant 0 : i32
    %c0_i32_1 = arith.constant 0 : i32
    return %c0_i32, %c0_i32_0 : i32, i32
  }
  func.func @transform_9(%arg0: i32) -> (i32, i32, i32) {
    %c0_i32 = arith.constant 0 : i32
    %c0_i32_0 = arith.constant 0 : i32
    %c0_i32_1 = arith.constant 0 : i32
    return %arg0, %c0_i32, %c0_i32_0 : i32, i32, i32
  }
}

</mosaic_0001>

<llo_original>
// kernel: basic_block_forward.1
$region0: #{basic_block_forward.1}
  #allocation0 [shape = 'u32[]', space=smem, size = 0x4, offset = 0x4, fixed_abs, tag = 'smem constant byte address 0x4 - core index']
  #allocation1 [shape = 'u32[144,128]{1,0:T(1,128)}', space=vmem, size = 0x12000, scoped, tag = 'internal scratch']
  %s0 = inlined_call_operand.vmem [shape: f32[2,8,256], index: 0, kind: input, shape index: {}]
  %s1 = inlined_call_operand.vmem [shape: s32[1,256], index: 1, kind: input, shape index: {}]
  %s2 = inlined_call_operand.vmem [shape: s32[1,256], index: 2, kind: input, shape index: {}]
  %s3 = inlined_call_operand.vmem [shape: f32[4,4], index: 3, kind: input, shape index: {}]
  %s4 = inlined_call_operand.vmem [shape: f32[4,1], index: 4, kind: input, shape index: {}]
  %s5 = inlined_call_operand.vmem [shape: f32[4,25], index: 5, kind: input, shape index: {}]
  %s6 = inlined_call_operand.vmem [shape: f32[4,1], index: 6, kind: input, shape index: {}]
  %s7 = inlined_call_operand.vmem [shape: f32[4,4], index: 7, kind: input, shape index: {}]
  %s8 = inlined_call_operand.vmem [shape: f32[4,1], index: 8, kind: input, shape index: {}]
  %s9 = inlined_call_operand.vmem [shape: f32[2,8,256], index: 9, kind: output, shape index: {}]
  %s10 = sld [smem:[#allocation0]]
  $region69: #{basic_block_forward.1} parent=0
    _
  %s12 = ssub.s32 1, %s10
  %s13 = scalar_select 0, %s12, %s10
  loop: start=0, step=1, limit=4
  $region2: #{basic_block_forward.1} parent=0 // loop_pre_header
    _
  $region3: #{basic_block_forward.1} parent=0 // loop_header
    %s15 = sphi 0, %s19
    %p16 = scmp.ge.s32.totalorder %s15, 4
    %s25 = sphi 0, %s27
    %s28 = sphi 0, %s25
    %s29 = sphi 0, %s28
    %s45 = sphi 0, %s29
    %s49 = sphi 0, %s49
    %s51 = sphi 0, %s49
    %s52 = sphi 0, %s51
    %s66 = sphi 0, %s52
    %s70 = sphi 0, %s70
    %s72 = sphi 0, %s70
    %s73 = sphi 0, %s72
    %s87 = sphi 0, %s73
    %s91 = sphi 0, %s91
    %s93 = sphi 0, %s91
    %s94 = sphi 0, %s93
    %s108 = sphi 0, %s94
    %s112 = sphi 0, %s112
    %s114 = sphi 0, %s112
    %s115 = sphi 0, %s114
    %s129 = sphi 0, %s115
    %s133 = sphi 0, %s133
    %s135 = sphi 0, %s133
    %s136 = sphi 0, %s135
    %s150 = sphi 0, %s136
    %s154 = sphi 0, %s154
    %s156 = sphi 0, %s154
    %s157 = sphi 0, %s156
    %s171 = sphi 0, %s157
    %s175 = sphi 0, %s175
    %s177 = sphi 0, %s175
    %s178 = sphi 0, %s177
    %s192 = sphi 0, %s178
    %s196 = sphi 0, %s196
    %s198 = sphi 0, %s196
    %s199 = sphi 0, %s198
    %s213 = sphi 0, %s199
    %s219 = sphi 0, %s221
    %s222 = sphi 0, %s219
    %s223 = sphi 0, %s222
    %s239 = sphi 0, %s223
  $region4: #{basic_block_forward.1} parent=0 // loop_header_branch
    %18 = sbr.rel (%p16) target = $region8
  $region5: #{basic_block_forward.1} parent=0 // loop_body
    %s20 = ssub.s32 %s15, 1
    %s21 = ssub.s32 %s15, 2
    %s22 = sadd.s32 %s15, 1
    %s23 = ssub.s32 %s15, %s22
    %p24 = scmp.eq.s32.totalorder %s23, 0
    %s26 = sadd.s32 %s25, 1
    %s27 = scalar_select %p24, %s25, %s26
    %p30 = pneg %p24
    %p31 = scmp.eq.s32.totalorder %s15, 1
    %p32 = por %p30, %p31
    %p33 = scmp.ne.s32.totalorder %s25, %s28
    %p34 = scmp.eq.s32.totalorder %s15, 0
    %p35 = por %p33, %p34
    %p36 = scmp.ne.s32.totalorder %s25, %s28
    %p37 = scmp.eq.s32.totalorder %s20, 1
    %p38 = por %p36, %p37
    %p39 = scmp.ne.s32.totalorder %s28, %s29
    %p40 = scmp.eq.s32.totalorder %s20, 0
    %p41 = por %p39, %p40
    %p42 = scmp.ne.s32.totalorder %s28, %s29
    %p43 = scmp.eq.s32.totalorder %s21, 1
    %p44 = por %p42, %p43
    %p46 = scmp.ne.s32.totalorder %s29, %s45
    %p47 = scmp.eq.s32.totalorder %s21, 0
    %p48 = por %p46, %p47
    %s50 = sadd.s32 %s49, 1
    %p53 = scmp.eq.s32.totalorder %s15, 1
    %p54 = scmp.ne.s32.totalorder %s49, %s51
    %p55 = scmp.eq.s32.totalorder %s15, 0
    %p56 = por %p54, %p55
    %p57 = scmp.ne.s32.totalorder %s49, %s51
    %p58 = scmp.eq.s32.totalorder %s20, 1
    %p59 = por %p57, %p58
    %p60 = scmp.ne.s32.totalorder %s51, %s52
    %p61 = scmp.eq.s32.totalorder %s20, 0
    %p62 = por %p60, %p61
    %p63 = scmp.ne.s32.totalorder %s51, %s52
    %p64 = scmp.eq.s32.totalorder %s21, 1
    %p65 = por %p63, %p64
    %p67 = scmp.ne.s32.totalorder %s52, %s66
    %p68 = scmp.eq.s32.totalorder %s21, 0
    %p69 = por %p67, %p68
    %s71 = sadd.s32 %s70, 1
    %p74 = scmp.eq.s32.totalorder %s15, 1
    %p75 = scmp.ne.s32.totalorder %s70, %s72
    %p76 = scmp.eq.s32.totalorder %s15, 0
    %p77 = por %p75, %p76
    %p78 = scmp.ne.s32.totalorder %s70, %s72
    %p79 = scmp.eq.s32.totalorder %s20, 1
    %p80 = por %p78, %p79
    %p81 = scmp.ne.s32.totalorder %s72, %s73
    %p82 = scmp.eq.s32.totalorder %s20, 0
    %p83 = por %p81, %p82
    %p84 = scmp.ne.s32.totalorder %s72, %s73
    %p85 = scmp.eq.s32.totalorder %s21, 1
    %p86 = por %p84, %p85
    %p88 = scmp.ne.s32.totalorder %s73, %s87
    %p89 = scmp.eq.s32.totalorder %s21, 0
    %p90 = por %p88, %p89
    %s92 = sadd.s32 %s91, 1
    %p95 = scmp.eq.s32.totalorder %s15, 1
    %p96 = scmp.ne.s32.totalorder %s91, %s93
    %p97 = scmp.eq.s32.totalorder %s15, 0
    %p98 = por %p96, %p97
    %p99 = scmp.ne.s32.totalorder %s91, %s93
    %p100 = scmp.eq.s32.totalorder %s20, 1
    %p101 = por %p99, %p100
    %p102 = scmp.ne.s32.totalorder %s93, %s94
    %p103 = scmp.eq.s32.totalorder %s20, 0
    %p104 = por %p102, %p103
    %p105 = scmp.ne.s32.totalorder %s93, %s94
    %p106 = scmp.eq.s32.totalorder %s21, 1
    %p107 = por %p105, %p106
    %p109 = scmp.ne.s32.totalorder %s94, %s108
    %p110 = scmp.eq.s32.totalorder %s21, 0
    %p111 = por %p109, %p110
    %s113 = sadd.s32 %s112, 1
    %p116 = scmp.eq.s32.totalorder %s15, 1
    %p117 = scmp.ne.s32.totalorder %s112, %s114
    %p118 = scmp.eq.s32.totalorder %s15, 0
    %p119 = por %p117, %p118
    %p120 = scmp.ne.s32.totalorder %s112, %s114
    %p121 = scmp.eq.s32.totalorder %s20, 1
    %p122 = por %p120, %p121
    %p123 = scmp.ne.s32.totalorder %s114, %s115
    %p124 = scmp.eq.s32.totalorder %s20, 0
    %p125 = por %p123, %p124
    %p126 = scmp.ne.s32.totalorder %s114, %s115
    %p127 = scmp.eq.s32.totalorder %s21, 1
    %p128 = por %p126, %p127
    %p130 = scmp.ne.s32.totalorder %s115, %s129
    %p131 = scmp.eq.s32.totalorder %s21, 0
    %p132 = por %p130, %p131
    %s134 = sadd.s32 %s133, 1
    %p137 = scmp.eq.s32.totalorder %s15, 1
    %p138 = scmp.ne.s32.totalorder %s133, %s135
    %p139 = scmp.eq.s32.totalorder %s15, 0
    %p140 = por %p138, %p139
    %p141 = scmp.ne.s32.totalorder %s133, %s135
    %p142 = scmp.eq.s32.totalorder %s20, 1
    %p143 = por %p141, %p142
    %p144 = scmp.ne.s32.totalorder %s135, %s136
    %p145 = scmp.eq.s32.totalorder %s20, 0
    %p146 = por %p144, %p145
    %p147 = scmp.ne.s32.totalorder %s135, %s136
    %p148 = scmp.eq.s32.totalorder %s21, 1
    %p149 = por %p147, %p148
    %p151 = scmp.ne.s32.totalorder %s136, %s150
    %p152 = scmp.eq.s32.totalorder %s21, 0
    %p153 = por %p151, %p152
    %s155 = sadd.s32 %s154, 1
    %p158 = scmp.eq.s32.totalorder %s15, 1
    %p159 = scmp.ne.s32.totalorder %s154, %s156
    %p160 = scmp.eq.s32.totalorder %s15, 0
    %p161 = por %p159, %p160
    %p162 = scmp.ne.s32.totalorder %s154, %s156
    %p163 = scmp.eq.s32.totalorder %s20, 1
    %p164 = por %p162, %p163
    %p165 = scmp.ne.s32.totalorder %s156, %s157
    %p166 = scmp.eq.s32.totalorder %s20, 0
    %p167 = por %p165, %p166
    %p168 = scmp.ne.s32.totalorder %s156, %s157
    %p169 = scmp.eq.s32.totalorder %s21, 1
    %p170 = por %p168, %p169
    %p172 = scmp.ne.s32.totalorder %s157, %s171
    %p173 = scmp.eq.s32.totalorder %s21, 0
    %p174 = por %p172, %p173
    %s176 = sadd.s32 %s175, 1
    %p179 = scmp.eq.s32.totalorder %s15, 1
    %p180 = scmp.ne.s32.totalorder %s175, %s177
    %p181 = scmp.eq.s32.totalorder %s15, 0
    %p182 = por %p180, %p181
    %p183 = scmp.ne.s32.totalorder %s175, %s177
    %p184 = scmp.eq.s32.totalorder %s20, 1
    %p185 = por %p183, %p184
    %p186 = scmp.ne.s32.totalorder %s177, %s178
    %p187 = scmp.eq.s32.totalorder %s20, 0
    %p188 = por %p186, %p187
    %p189 = scmp.ne.s32.totalorder %s177, %s178
    %p190 = scmp.eq.s32.totalorder %s21, 1
    %p191 = por %p189, %p190
    %p193 = scmp.ne.s32.totalorder %s178, %s192
    %p194 = scmp.eq.s32.totalorder %s21, 0
    %p195 = por %p193, %p194
    %s197 = sadd.s32 %s196, 1
    %p200 = scmp.eq.s32.totalorder %s15, 1
    %p201 = scmp.ne.s32.totalorder %s196, %s198
    %p202 = scmp.eq.s32.totalorder %s15, 0
    %p203 = por %p201, %p202
    %p204 = scmp.ne.s32.totalorder %s196, %s198
    %p205 = scmp.eq.s32.totalorder %s20, 1
    %p206 = por %p204, %p205
    %p207 = scmp.ne.s32.totalorder %s198, %s199
    %p208 = scmp.eq.s32.totalorder %s20, 0
    %p209 = por %p207, %p208
    %p210 = scmp.ne.s32.totalorder %s198, %s199
    %p211 = scmp.eq.s32.totalorder %s21, 1
    %p212 = por %p210, %p211
    %p214 = scmp.ne.s32.totalorder %s199, %s213
    %p215 = scmp.eq.s32.totalorder %s21, 0
    %p216 = por %p214, %p215
    %s217 = ssub.s32 %s15, %s22
    %p218 = scmp.eq.s32.totalorder %s217, 0
    %s220 = sadd.s32 %s219, 1
    %s221 = scalar_select %p218, %s219, %s220
    %p224 = pneg %p218
    %p225 = scmp.eq.s32.totalorder %s15, 1
    %p226 = por %p224, %p225
    %p227 = scmp.ne.s32.totalorder %s219, %s222
    %p228 = scmp.eq.s32.totalorder %s15, 0
    %p229 = por %p227, %p228
    %p230 = scmp.ne.s32.totalorder %s219, %s222
    %p231 = scmp.eq.s32.totalorder %s20, 1
    %p232 = por %p230, %p231
    %p233 = scmp.ne.s32.totalorder %s222, %s223
    %p234 = scmp.eq.s32.totalorder %s20, 0
    %p235 = por %p233, %p234
    %p236 = scmp.ne.s32.totalorder %s222, %s223
    %p237 = scmp.eq.s32.totalorder %s21, 1
    %p238 = por %p236, %p237
    %p240 = scmp.ne.s32.totalorder %s223, %s239
    %p241 = scmp.eq.s32.totalorder %s21, 0
    %p242 = por %p240, %p241
    %p243 = scmp.le.s32.totalorder 1, %s15
    %p244 = scmp.lt.s32.totalorder %s15, 3
    %p245 = pnand %p243, %p244
    %p246 = pneg %p245
    // Predicated region
    $region9: #{basic_block_forward.1} parent=5 // pred_check
      _
    $region10: #{basic_block_forward.1} parent=5 // pred_check_branch
      %248 = sbr.rel (%p245) target = $region12
    $region11: #{basic_block_forward.1} parent=5 // pred_region
      %s249 = ssub.s32 %s15, 1
      // Predicated region
      $region13: #{basic_block_forward.1} parent=11 // pred_check
        %p250 = pneg %p62
      $region14: #{basic_block_forward.1} parent=11 // pred_check_branch
        %252 = sbr.rel (%p250) target = $region16
      $region15: #{basic_block_forward.1} parent=11 // pred_region
        _
      $region16: #{basic_block_forward.1} parent=11 // pred_fallthru
        _
      // Predicated region
      $region17: #{basic_block_forward.1} parent=11 // pred_check
        %p253 = pneg %p83
      $region18: #{basic_block_forward.1} parent=11 // pred_check_branch
        %255 = sbr.rel (%p253) target = $region20
      $region19: #{basic_block_forward.1} parent=11 // pred_region
        _
      $region20: #{basic_block_forward.1} parent=11 // pred_fallthru
        _
      // Predicated region
      $region21: #{basic_block_forward.1} parent=11 // pred_check
        %p256 = pneg %p104
      $region22: #{basic_block_forward.1} parent=11 // pred_check_branch
        %258 = sbr.rel (%p256) target = $region24
      $region23: #{basic_block_forward.1} parent=11 // pred_region
        _
      $region24: #{basic_block_forward.1} parent=11 // pred_fallthru
        _
      // Predicated region
      $region25: #{basic_block_forward.1} parent=11 // pred_check
        %p259 = pneg %p125
      $region26: #{basic_block_forward.1} parent=11 // pred_check_branch
        %261 = sbr.rel (%p259) target = $region28
      $region27: #{basic_block_forward.1} parent=11 // pred_region
        _
      $region28: #{basic_block_forward.1} parent=11 // pred_fallthru
        _
      // Predicated region
      $region29: #{basic_block_forward.1} parent=11 // pred_check
        %p262 = pneg %p146
      $region30: #{basic_block_forward.1} parent=11 // pred_check_branch
        %264 = sbr.rel (%p262) target = $region32
      $region31: #{basic_block_forward.1} parent=11 // pred_region
        _
      $region32: #{basic_block_forward.1} parent=11 // pred_fallthru
        _
      // Predicated region
      $region33: #{basic_block_forward.1} parent=11 // pred_check
        %p265 = pneg %p167
      $region34: #{basic_block_forward.1} parent=11 // pred_check_branch
        %267 = sbr.rel (%p265) target = $region36
      $region35: #{basic_block_forward.1} parent=11 // pred_region
        _
      $region36: #{basic_block_forward.1} parent=11 // pred_fallthru
        _
      // Predicated region
      $region37: #{basic_block_forward.1} parent=11 // pred_check
        %p268 = pneg %p188
      $region38: #{basic_block_forward.1} parent=11 // pred_check_branch
        %270 = sbr.rel (%p268) target = $region40
      $region39: #{basic_block_forward.1} parent=11 // pred_region
        _
      $region40: #{basic_block_forward.1} parent=11 // pred_fallthru
        _
      // Predicated region
      $region41: #{basic_block_forward.1} parent=11 // pred_check
        %p271 = pneg %p209
      $region42: #{basic_block_forward.1} parent=11 // pred_check_branch
        %273 = sbr.rel (%p271) target = $region44
      $region43: #{basic_block_forward.1} parent=11 // pred_region
        _
      $region44: #{basic_block_forward.1} parent=11 // pred_fallthru
        _
    $region12: #{basic_block_forward.1} parent=5 // pred_fallthru
      _
    %p274 = scmp.lt.s32.totalorder %s15, 2
    // Predicated region
    $region45: #{basic_block_forward.1} parent=5 // pred_check
      %p275 = pneg %p274
    $region46: #{basic_block_forward.1} parent=5 // pred_check_branch
      %277 = sbr.rel (%p275) target = $region48
    $region47: #{basic_block_forward.1} parent=5 // pred_region
      // Predicated region
      $region49: #{basic_block_forward.1} parent=47 // pred_check
        %p278 = pneg %p35
      $region50: #{basic_block_forward.1} parent=47 // pred_check_branch
        %280 = sbr.rel (%p278) target = $region52
      $region51: #{basic_block_forward.1} parent=47 // pred_region
        %p281 = scmp.lt.s32.totalorder %s15, 1
        %s282 = scalar_select %p281, %s15, 1
        %s283 = smul.addr %s282, 2
        %s284 = smul.addr %s283, 8
        %s285 = scalar_lea.vmem %s0, %s284
      $region52: #{basic_block_forward.1} parent=47 // pred_fallthru
        _
    $region48: #{basic_block_forward.1} parent=5 // pred_fallthru
      _
    %p286 = scmp.le.s32.totalorder 1, %s15
    %p287 = scmp.lt.s32.totalorder %s15, 3
    %p288 = pnand %p286, %p287
    %p289 = pneg %p288
    // Predicated region
    $region53: #{basic_block_forward.1} parent=5 // pred_check
      _
    $region54: #{basic_block_forward.1} parent=5 // pred_check_branch
      %291 = sbr.rel (%p288) target = $region56
    $region55: #{basic_block_forward.1} parent=5 // pred_region
      %s292 = ssub.s32 %s15, 1
      %p293 = scmp.lt.s32.totalorder %s20, 1
      %s294 = scalar_select %p293, %s20, 1
      %s295 = smul.addr %s294, 2
      %s296 = smul.addr %s295, 8
      %s297 = scalar_lea.vmem %s0, %s296
      %p298 = pneg %p41
      %p299 = pneg %p38
      %p300 = pneg %p62
      %p301 = pneg %p59
      %p302 = pneg %p83
      %p303 = pneg %p80
      %p304 = pneg %p104
      %p305 = pneg %p101
      %p306 = pneg %p125
      %p307 = pneg %p122
      %p308 = pneg %p146
      %p309 = pneg %p143
      %p310 = pneg %p167
      %p311 = pneg %p164
      %p312 = pneg %p188
      %p313 = pneg %p185
      %p314 = pneg %p209
      %p315 = pneg %p206
      %p316 = pneg %p235
      %p317 = pneg %p232
      %p318 = scmp.lt.s32.totalorder %s20, 1
      %s319 = scalar_select %p318, %s20, 1
      %s320 = smul.addr %s319, 2
      %s321 = smul.addr %s320, 8
      %s322 = scalar_lea.vmem %s9, %s321
      %p323 = scmp.lt.s32.totalorder %s20, 1
      %s324 = scalar_select %p323, %s20, 1
      %s325 = smul.addr %s324, 2
      %s326 = smul.addr %s325, 8
      %s327 = scalar_lea.vmem %s0, %s326
      %p328 = scmp.lt.s32.totalorder %s20, 1
      %s329 = scalar_select %p328, %s20, 1
      %s330 = smul.addr %s329, 2
      %s331 = smul.addr %s330, 8
      %s332 = scalar_lea.vmem %s9, %s331
      %v333 = vld [vmem:[%s3] sm:$0xf]
      %v334 = vld [vmem:[%s4] sm:$0xf]
      %v335 = vld [vmem:[%s5] sm:$0xf]
      %v336 = vld [vmem:[%s6] sm:$0xf]
      %v337 = vld [vmem:[%s7] sm:$0xf]
      %v338 = vld [vmem:[%s8] sm:$0xf]
      %v339 = vld [vmem:[%s1] sm:$0x3]
      %v340 = vld [vmem:[%s2] sm:$0x3]
      %v341 = vadd.s32 %v339, 4294967294
      %vm342 = vcmp.ge.s32.totalorder %v341, 0
      %vm343 = vcmp.lt.s32.totalorder %v341, 16
      %vm344 = vmand %vm342, %vm343
      %v345 = vsel %vm344, 1, 0
      %v346 = vcvt.s32.f32 %v345
      %v347 = vadd.s32 %v339, 4294967295
      %vm348 = vcmp.ge.s32.totalorder %v347, 0
      %vm349 = vcmp.lt.s32.totalorder %v347, 16
      %vm350 = vmand %vm348, %vm349
      %v351 = vsel %vm350, 1, 0
      %v352 = vcvt.s32.f32 %v351
      %vm353 = vcmp.ge.s32.totalorder %v339, 0
      %vm354 = vcmp.lt.s32.totalorder %v339, 16
      %vm355 = vmand %vm353, %vm354
      %v356 = vsel %vm355, 1, 0
      %v357 = vcvt.s32.f32 %v356
      %v358 = vadd.s32 %v339, 1
      %vm359 = vcmp.ge.s32.totalorder %v358, 0
      %vm360 = vcmp.lt.s32.totalorder %v358, 16
      %vm361 = vmand %vm359, %vm360
      %v362 = vsel %vm361, 1, 0
      %v363 = vcvt.s32.f32 %v362
      %v364 = vadd.s32 %v339, 2
      %vm365 = vcmp.ge.s32.totalorder %v364, 0
      %vm366 = vcmp.lt.s32.totalorder %v364, 16
      %vm367 = vmand %vm365, %vm366
      %v368 = vsel %vm367, 1, 0
      %v369 = vcvt.s32.f32 %v368
      %v370 = vadd.s32 %v340, 4294967294
      %vm371 = vcmp.ge.s32.totalorder %v370, 0
      %vm372 = vcmp.lt.s32.totalorder %v370, 16
      %vm373 = vmand %vm371, %vm372
      %v374 = vsel %vm373, 1, 0
      %v375 = vcvt.s32.f32 %v374
      %v376 = vadd.s32 %v340, 4294967295
      %vm377 = vcmp.ge.s32.totalorder %v376, 0
      %vm378 = vcmp.lt.s32.totalorder %v376, 16
      %vm379 = vmand %vm377, %vm378
      %v380 = vsel %vm379, 1, 0
      %v381 = vcvt.s32.f32 %v380
      %vm382 = vcmp.ge.s32.totalorder %v340, 0
      %vm383 = vcmp.lt.s32.totalorder %v340, 16
      %vm384 = vmand %vm382, %vm383
      %v385 = vsel %vm384, 1, 0
      %v386 = vcvt.s32.f32 %v385
      %v387 = vadd.s32 %v340, 1
      %vm388 = vcmp.ge.s32.totalorder %v387, 0
      %vm389 = vcmp.lt.s32.totalorder %v387, 16
      %vm390 = vmand %vm388, %vm389
      %v391 = vsel %vm390, 1, 0
      %v392 = vcvt.s32.f32 %v391
      %v393 = vadd.s32 %v340, 2
      %vm394 = vcmp.ge.s32.totalorder %v393, 0
      %vm395 = vcmp.lt.s32.totalorder %v393, 16
      %vm396 = vmand %vm394, %vm395
      %v397 = vsel %vm396, 1, 0
      %v398 = vcvt.s32.f32 %v397
      %v399 = vld [vmem:[%s327] sm:$0xff]
      %v400 = vld [vmem:[%s327 + $0x8] sm:$0xff]
      %402 = vset.pattern.permute.xlu0 0
      %403 = vperm.xlu0 %402, %v333
      %v404 = vpop.permute.xlu0 %403
      %v406 = vlaneseq
      %v407 = vshrl.u32 %v406, 7
      %v408 = vsub.s32 4, %v407
      %v409 = vrot.slane %v399, %v408
      %v410 = vlaneseq
      %v411 = vshrl.u32 %v410, 7
      %v412 = vsub.s32 4, %v411
      %v413 = vrot.slane %v400, %v412
      %v414 = vmul.f32 %v404, %v409
      %v415 = vmul.f32 %v404, %v413
      %416 = vset.pattern.permute.xlu0 1
      %417 = vperm.xlu0 %416, %v333
      %v418 = vpop.permute.xlu0 %417
      %v420 = vlaneseq
      %v421 = vshrl.u32 %v420, 7
      %v422 = vsub.s32 5, %v421
      %v423 = vrot.slane %v399, %v422
      %v424 = vlaneseq
      %v425 = vshrl.u32 %v424, 7
      %v426 = vsub.s32 5, %v425
      %v427 = vrot.slane %v400, %v426
      %v428 = vmul.f32 %v418, %v423
      %v429 = vmul.f32 %v418, %v427
      %v430 = vadd.f32 %v414, %v428
      %v431 = vadd.f32 %v415, %v429
      %432 = vset.pattern.permute.xlu0 2
      %433 = vperm.xlu0 %432, %v333
      %v434 = vpop.permute.xlu0 %433
      %v436 = vlaneseq
      %v437 = vshrl.u32 %v436, 7
      %v438 = vsub.s32 6, %v437
      %v439 = vrot.slane %v399, %v438
      %v440 = vlaneseq
      %v441 = vshrl.u32 %v440, 7
      %v442 = vsub.s32 6, %v441
      %v443 = vrot.slane %v400, %v442
      %v444 = vmul.f32 %v434, %v439
      %v445 = vmul.f32 %v434, %v443
      %v446 = vadd.f32 %v430, %v444
      %v447 = vadd.f32 %v431, %v445
      %448 = vset.pattern.permute.xlu0 3
      %449 = vperm.xlu0 %448, %v333
      %v450 = vpop.permute.xlu0 %449
      %v452 = vlaneseq
      %v453 = vshrl.u32 %v452, 7
      %v454 = vsub.s32 7, %v453
      %v455 = vrot.slane %v399, %v454
      %v456 = vlaneseq
      %v457 = vshrl.u32 %v456, 7
      %v458 = vsub.s32 7, %v457
      %v459 = vrot.slane %v400, %v458
      %v460 = vmul.f32 %v450, %v455
      %v461 = vmul.f32 %v450, %v459
      %v462 = vadd.f32 %v446, %v460
      %v463 = vadd.f32 %v447, %v461
      %465 = vset.pattern.permute.xlu0 0
      %466 = vperm.xlu0 %465, %v334
      %v467 = vpop.permute.xlu0 %466
      %v469 = vadd.f32 %v462, %v467
      %v470 = vadd.f32 %v463, %v467
      %v471 = vmax.f32 %v469, 0.0
      %v472 = vmax.f32 %v470, 0.0
      %473 = vrot.lane.b32.xlu0 %v471, 34
      %v474 = vpop.permute.xlu0 %473
      %475 = vrot.lane.b32.xlu0 %v472, 34
      %v476 = vpop.permute.xlu0 %475
      %v477 = vlaneseq
      %v478 = vand.u32 %v477, 127
      %vm479 = vcmp.lt.s32.totalorder %v478, 34
      %v480 = vsel %vm479, %v474, %v476
      %v481 = vsel %vm479, %v476, %v474
      %483 = vset.pattern.permute.xlu0 0
      %484 = vperm.xlu0 %483, %v335
      %v485 = vpop.permute.xlu0 %484
      %v487 = vmul.f32 %v481, %v485
      %v488 = vmul.f32 %v480, %v485
      %v489 = vmul.f32 %v346, %v375
      %v491 = vlaneseq
      %v492 = vshrl.u32 %v491, 7
      %v493 = vsub.s32 0, %v492
      %v494 = vrot.slane %v489, %v493
      %v495 = vlaneseq
      %v496 = vshrl.u32 %v495, 7
      %v497 = vsub.s32 1, %v496
      %v498 = vrot.slane %v489, %v497
      %v501 = vmul.f32 %v487, %v494
      %v502 = vmul.f32 %v488, %v498
      %v503 = vadd.f32 %v501, 0.0
      %v504 = vadd.f32 %v502, 0.0
      %505 = vrot.lane.b32.xlu0 %v471, 33
      %v506 = vpop.permute.xlu0 %505
      %507 = vrot.lane.b32.xlu0 %v472, 33
      %v508 = vpop.permute.xlu0 %507
      %vm509 = vcmp.lt.s32.totalorder %v478, 33
      %v510 = vsel %vm509, %v506, %v508
      %v511 = vsel %vm509, %v508, %v506
      %512 = vset.pattern.permute.xlu0 1
      %513 = vperm.xlu0 %512, %v335
      %v514 = vpop.permute.xlu0 %513
      %v516 = vmul.f32 %v511, %v514
      %v517 = vmul.f32 %v510, %v514
      %v518 = vmul.f32 %v346, %v381
      %v520 = vlaneseq
      %v521 = vshrl.u32 %v520, 7
      %v522 = vsub.s32 0, %v521
      %v523 = vrot.slane %v518, %v522
      %v524 = vlaneseq
      %v525 = vshrl.u32 %v524, 7
      %v526 = vsub.s32 1, %v525
      %v527 = vrot.slane %v518, %v526
      %v530 = vmul.f32 %v516, %v523
      %v531 = vmul.f32 %v517, %v527
      %v532 = vadd.f32 %v503, %v530
      %v533 = vadd.f32 %v504, %v531
      %534 = vrot.lane.b32.xlu0 %v471, 32
      %v535 = vpop.permute.xlu0 %534
      %536 = vrot.lane.b32.xlu0 %v472, 32
      %v537 = vpop.permute.xlu0 %536
      %vm538 = vcmp.lt.s32.totalorder %v478, 32
      %v539 = vsel %vm538, %v535, %v537
      %v540 = vsel %vm538, %v537, %v535
      %541 = vset.pattern.permute.xlu0 2
      %542 = vperm.xlu0 %541, %v335
      %v543 = vpop.permute.xlu0 %542
      %v545 = vmul.f32 %v540, %v543
      %v546 = vmul.f32 %v539, %v543
      %v547 = vmul.f32 %v346, %v386
      %v549 = vlaneseq
      %v550 = vshrl.u32 %v549, 7
      %v551 = vsub.s32 0, %v550
      %v552 = vrot.slane %v547, %v551
      %v553 = vlaneseq
      %v554 = vshrl.u32 %v553, 7
      %v555 = vsub.s32 1, %v554
      %v556 = vrot.slane %v547, %v555
      %v559 = vmul.f32 %v545, %v552
      %v560 = vmul.f32 %v546, %v556
      %v561 = vadd.f32 %v532, %v559
      %v562 = vadd.f32 %v533, %v560
      %563 = vrot.lane.b32.xlu0 %v471, 31
      %v564 = vpop.permute.xlu0 %563
      %565 = vrot.lane.b32.xlu0 %v472, 31
      %v566 = vpop.permute.xlu0 %565
      %vm567 = vcmp.lt.s32.totalorder %v478, 31
      %v568 = vsel %vm567, %v564, %v566
      %v569 = vsel %vm567, %v566, %v564
      %570 = vset.pattern.permute.xlu0 3
      %571 = vperm.xlu0 %570, %v335
      %v572 = vpop.permute.xlu0 %571
      %v574 = vmul.f32 %v569, %v572
      %v575 = vmul.f32 %v568, %v572
      %v576 = vmul.f32 %v346, %v392
      %v578 = vlaneseq
      %v579 = vshrl.u32 %v578, 7
      %v580 = vsub.s32 0, %v579
      %v581 = vrot.slane %v576, %v580
      %v582 = vlaneseq
      %v583 = vshrl.u32 %v582, 7
      %v584 = vsub.s32 1, %v583
      %v585 = vrot.slane %v576, %v584
      %v588 = vmul.f32 %v574, %v581
      %v589 = vmul.f32 %v575, %v585
      %v590 = vadd.f32 %v561, %v588
      %v591 = vadd.f32 %v562, %v589
      %592 = vrot.lane.b32.xlu0 %v471, 30
      %v593 = vpop.permute.xlu0 %592
      %594 = vrot.lane.b32.xlu0 %v472, 30
      %v595 = vpop.permute.xlu0 %594
      %vm596 = vcmp.lt.s32.totalorder %v478, 30
      %v597 = vsel %vm596, %v593, %v595
      %v598 = vsel %vm596, %v595, %v593
      %599 = vset.pattern.permute.xlu0 4
      %600 = vperm.xlu0 %599, %v335
      %v601 = vpop.permute.xlu0 %600
      %v603 = vmul.f32 %v598, %v601
      %v604 = vmul.f32 %v597, %v601
      %v605 = vmul.f32 %v346, %v398
      %v607 = vlaneseq
      %v608 = vshrl.u32 %v607, 7
      %v609 = vsub.s32 0, %v608
      %v610 = vrot.slane %v605, %v609
      %v611 = vlaneseq
      %v612 = vshrl.u32 %v611, 7
      %v613 = vsub.s32 1, %v612
      %v614 = vrot.slane %v605, %v613
      %v617 = vmul.f32 %v603, %v610
      %v618 = vmul.f32 %v604, %v614
      %v619 = vadd.f32 %v590, %v617
      %v620 = vadd.f32 %v591, %v618
      %621 = vrot.lane.b32.xlu0 %v471, 18
      %v622 = vpop.permute.xlu0 %621
      %623 = vrot.lane.b32.xlu0 %v472, 18
      %v624 = vpop.permute.xlu0 %623
      %vm625 = vcmp.lt.s32.totalorder %v478, 18
      %v626 = vsel %vm625, %v622, %v624
      %v627 = vsel %vm625, %v624, %v622
      %628 = vset.pattern.permute.xlu0 5
      %629 = vperm.xlu0 %628, %v335
      %v630 = vpop.permute.xlu0 %629
      %v632 = vmul.f32 %v627, %v630
      %v633 = vmul.f32 %v626, %v630
      %v634 = vmul.f32 %v352, %v375
      %v636 = vlaneseq
      %v637 = vshrl.u32 %v636, 7
      %v638 = vsub.s32 0, %v637
      %v639 = vrot.slane %v634, %v638
      %v640 = vlaneseq
      %v641 = vshrl.u32 %v640, 7
      %v642 = vsub.s32 1, %v641
      %v643 = vrot.slane %v634, %v642
      %v646 = vmul.f32 %v632, %v639
      %v647 = vmul.f32 %v633, %v643
      %v648 = vadd.f32 %v619, %v646
      %v649 = vadd.f32 %v620, %v647
      %650 = vrot.lane.b32.xlu0 %v471, 17
      %v651 = vpop.permute.xlu0 %650
      %652 = vrot.lane.b32.xlu0 %v472, 17
      %v653 = vpop.permute.xlu0 %652
      %vm654 = vcmp.lt.s32.totalorder %v478, 17
      %v655 = vsel %vm654, %v651, %v653
      %v656 = vsel %vm654, %v653, %v651
      %657 = vset.pattern.permute.xlu0 6
      %658 = vperm.xlu0 %657, %v335
      %v659 = vpop.permute.xlu0 %658
      %v661 = vmul.f32 %v656, %v659
      %v662 = vmul.f32 %v655, %v659
      %v663 = vmul.f32 %v352, %v381
      %v665 = vlaneseq
      %v666 = vshrl.u32 %v665, 7
      %v667 = vsub.s32 0, %v666
      %v668 = vrot.slane %v663, %v667
      %v669 = vlaneseq
      %v670 = vshrl.u32 %v669, 7
      %v671 = vsub.s32 1, %v670
      %v672 = vrot.slane %v663, %v671
      %v675 = vmul.f32 %v661, %v668
      %v676 = vmul.f32 %v662, %v672
      %v677 = vadd.f32 %v648, %v675
      %v678 = vadd.f32 %v649, %v676
      %679 = vrot.lane.b32.xlu0 %v471, 16
      %v680 = vpop.permute.xlu0 %679
      %681 = vrot.lane.b32.xlu0 %v472, 16
      %v682 = vpop.permute.xlu0 %681
      %vm683 = vcmp.lt.s32.totalorder %v478, 16
      %v684 = vsel %vm683, %v680, %v682
      %v685 = vsel %vm683, %v682, %v680
      %686 = vset.pattern.permute.xlu0 7
      %687 = vperm.xlu0 %686, %v335
      %v688 = vpop.permute.xlu0 %687
      %v690 = vmul.f32 %v685, %v688
      %v691 = vmul.f32 %v684, %v688
      %v692 = vmul.f32 %v352, %v386
      %v694 = vlaneseq
      %v695 = vshrl.u32 %v694, 7
      %v696 = vsub.s32 0, %v695
      %v697 = vrot.slane %v692, %v696
      %v698 = vlaneseq
      %v699 = vshrl.u32 %v698, 7
      %v700 = vsub.s32 1, %v699
      %v701 = vrot.slane %v692, %v700
      %v704 = vmul.f32 %v690, %v697
      %v705 = vmul.f32 %v691, %v701
      %v706 = vadd.f32 %v677, %v704
      %v707 = vadd.f32 %v678, %v705
      %708 = vrot.lane.b32.xlu0 %v471, 15
      %v709 = vpop.permute.xlu0 %708
      %710 = vrot.lane.b32.xlu0 %v472, 15
      %v711 = vpop.permute.xlu0 %710
      %vm712 = vcmp.lt.s32.totalorder %v478, 15
      %v713 = vsel %vm712, %v709, %v711
      %v714 = vsel %vm712, %v711, %v709
      %715 = vset.pattern.permute.xlu0 8
      %716 = vperm.xlu0 %715, %v335
      %v717 = vpop.permute.xlu0 %716
      %v719 = vmul.f32 %v714, %v717
      %v720 = vmul.f32 %v713, %v717
      %v721 = vmul.f32 %v352, %v392
      %v723 = vlaneseq
      %v724 = vshrl.u32 %v723, 7
      %v725 = vsub.s32 0, %v724
      %v726 = vrot.slane %v721, %v725
      %v727 = vlaneseq
      %v728 = vshrl.u32 %v727, 7
      %v729 = vsub.s32 1, %v728
      %v730 = vrot.slane %v721, %v729
      %v733 = vmul.f32 %v719, %v726
      %v734 = vmul.f32 %v720, %v730
      %v735 = vadd.f32 %v706, %v733
      %v736 = vadd.f32 %v707, %v734
      %737 = vrot.lane.b32.xlu0 %v471, 14
      %v738 = vpop.permute.xlu0 %737
      %739 = vrot.lane.b32.xlu0 %v472, 14
      %v740 = vpop.permute.xlu0 %739
      %vm741 = vcmp.lt.s32.totalorder %v478, 14
      %v742 = vsel %vm741, %v738, %v740
      %v743 = vsel %vm741, %v740, %v738
      %744 = vset.pattern.permute.xlu0 9
      %745 = vperm.xlu0 %744, %v335
      %v746 = vpop.permute.xlu0 %745
      %v748 = vmul.f32 %v743, %v746
      %v749 = vmul.f32 %v742, %v746
      %v750 = vmul.f32 %v352, %v398
      %v752 = vlaneseq
      %v753 = vshrl.u32 %v752, 7
      %v754 = vsub.s32 0, %v753
      %v755 = vrot.slane %v750, %v754
      %v756 = vlaneseq
      %v757 = vshrl.u32 %v756, 7
      %v758 = vsub.s32 1, %v757
      %v759 = vrot.slane %v750, %v758
      %v762 = vmul.f32 %v748, %v755
      %v763 = vmul.f32 %v749, %v759
      %v764 = vadd.f32 %v735, %v762
      %v765 = vadd.f32 %v736, %v763
      %766 = vrot.lane.b32.xlu0 %v471, 2
      %v767 = vpop.permute.xlu0 %766
      %768 = vrot.lane.b32.xlu0 %v472, 2
      %v769 = vpop.permute.xlu0 %768
      %vm770 = vcmp.lt.s32.totalorder %v478, 2
      %v771 = vsel %vm770, %v767, %v769
      %v772 = vsel %vm770, %v769, %v767
      %773 = vset.pattern.permute.xlu0 10
      %774 = vperm.xlu0 %773, %v335
      %v775 = vpop.permute.xlu0 %774
      %v777 = vmul.f32 %v772, %v775
      %v778 = vmul.f32 %v771, %v775
      %v779 = vmul.f32 %v357, %v375
      %v781 = vlaneseq
      %v782 = vshrl.u32 %v781, 7
      %v783 = vsub.s32 0, %v782
      %v784 = vrot.slane %v779, %v783
      %v785 = vlaneseq
      %v786 = vshrl.u32 %v785, 7
      %v787 = vsub.s32 1, %v786
      %v788 = vrot.slane %v779, %v787
      %v791 = vmul.f32 %v777, %v784
      %v792 = vmul.f32 %v778, %v788
      %v793 = vadd.f32 %v764, %v791
      %v794 = vadd.f32 %v765, %v792
      %795 = vrot.lane.b32.xlu0 %v471, 1
      %v796 = vpop.permute.xlu0 %795
      %797 = vrot.lane.b32.xlu0 %v472, 1
      %v798 = vpop.permute.xlu0 %797
      %vm799 = vcmp.lt.s32.totalorder %v478, 1
      %v800 = vsel %vm799, %v796, %v798
      %v801 = vsel %vm799, %v798, %v796
      %802 = vset.pattern.permute.xlu0 11
      %803 = vperm.xlu0 %802, %v335
      %v804 = vpop.permute.xlu0 %803
      %v806 = vmul.f32 %v801, %v804
      %v807 = vmul.f32 %v800, %v804
      %v808 = vmul.f32 %v357, %v381
      %v810 = vlaneseq
      %v811 = vshrl.u32 %v810, 7
      %v812 = vsub.s32 0, %v811
      %v813 = vrot.slane %v808, %v812
      %v814 = vlaneseq
      %v815 = vshrl.u32 %v814, 7
      %v816 = vsub.s32 1, %v815
      %v817 = vrot.slane %v808, %v816
      %v820 = vmul.f32 %v806, %v813
      %v821 = vmul.f32 %v807, %v817
      %v822 = vadd.f32 %v793, %v820
      %v823 = vadd.f32 %v794, %v821
      %824 = vset.pattern.permute.xlu0 12
      %825 = vperm.xlu0 %824, %v335
      %v826 = vpop.permute.xlu0 %825
      %v828 = vmul.f32 %v471, %v826
      %v829 = vmul.f32 %v472, %v826
      %v830 = vmul.f32 %v357, %v386
      %v832 = vlaneseq
      %v833 = vshrl.u32 %v832, 7
      %v834 = vsub.s32 0, %v833
      %v835 = vrot.slane %v830, %v834
      %v836 = vlaneseq
      %v837 = vshrl.u32 %v836, 7
      %v838 = vsub.s32 1, %v837
      %v839 = vrot.slane %v830, %v838
      %v842 = vmul.f32 %v828, %v835
      %v843 = vmul.f32 %v829, %v839
      %v844 = vadd.f32 %v822, %v842
      %v845 = vadd.f32 %v823, %v843
      %846 = vrot.lane.b32.xlu0 %v471, 127
      %v847 = vpop.permute.xlu0 %846
      %848 = vrot.lane.b32.xlu0 %v472, 127
      %v849 = vpop.permute.xlu0 %848
      %vm850 = vcmp.lt.s32.totalorder %v478, 127
      %v851 = vsel %vm850, %v847, %v849
      %v852 = vsel %vm850, %v849, %v847
      %853 = vset.pattern.permute.xlu0 13
      %854 = vperm.xlu0 %853, %v335
      %v855 = vpop.permute.xlu0 %854
      %v857 = vmul.f32 %v851, %v855
      %v858 = vmul.f32 %v852, %v855
      %v859 = vmul.f32 %v357, %v392
      %v861 = vlaneseq
      %v862 = vshrl.u32 %v861, 7
      %v863 = vsub.s32 0, %v862
      %v864 = vrot.slane %v859, %v863
      %v865 = vlaneseq
      %v866 = vshrl.u32 %v865, 7
      %v867 = vsub.s32 1, %v866
      %v868 = vrot.slane %v859, %v867
      %v871 = vmul.f32 %v857, %v864
      %v872 = vmul.f32 %v858, %v868
      %v873 = vadd.f32 %v844, %v871
      %v874 = vadd.f32 %v845, %v872
      %875 = vrot.lane.b32.xlu0 %v471, 126
      %v876 = vpop.permute.xlu0 %875
      %877 = vrot.lane.b32.xlu0 %v472, 126
      %v878 = vpop.permute.xlu0 %877
      %vm879 = vcmp.lt.s32.totalorder %v478, 126
      %v880 = vsel %vm879, %v876, %v878
      %v881 = vsel %vm879, %v878, %v876
      %882 = vset.pattern.permute.xlu0 14
      %883 = vperm.xlu0 %882, %v335
      %v884 = vpop.permute.xlu0 %883
      %v886 = vmul.f32 %v880, %v884
      %v887 = vmul.f32 %v881, %v884
      %v888 = vmul.f32 %v357, %v398
      %v890 = vlaneseq
      %v891 = vshrl.u32 %v890, 7
      %v892 = vsub.s32 0, %v891
      %v893 = vrot.slane %v888, %v892
      %v894 = vlaneseq
      %v895 = vshrl.u32 %v894, 7
      %v896 = vsub.s32 1, %v895
      %v897 = vrot.slane %v888, %v896
      %v900 = vmul.f32 %v886, %v893
      %v901 = vmul.f32 %v887, %v897
      %v902 = vadd.f32 %v873, %v900
      %v903 = vadd.f32 %v874, %v901
      %904 = vrot.lane.b32.xlu0 %v471, 114
      %v905 = vpop.permute.xlu0 %904
      %906 = vrot.lane.b32.xlu0 %v472, 114
      %v907 = vpop.permute.xlu0 %906
      %vm908 = vcmp.lt.s32.totalorder %v478, 114
      %v909 = vsel %vm908, %v905, %v907
      %v910 = vsel %vm908, %v907, %v905
      %911 = vset.pattern.permute.xlu0 15
      %912 = vperm.xlu0 %911, %v335
      %v913 = vpop.permute.xlu0 %912
      %v915 = vmul.f32 %v909, %v913
      %v916 = vmul.f32 %v910, %v913
      %v917 = vmul.f32 %v363, %v375
      %v919 = vlaneseq
      %v920 = vshrl.u32 %v919, 7
      %v921 = vsub.s32 0, %v920
      %v922 = vrot.slane %v917, %v921
      %v923 = vlaneseq
      %v924 = vshrl.u32 %v923, 7
      %v925 = vsub.s32 1, %v924
      %v926 = vrot.slane %v917, %v925
      %v929 = vmul.f32 %v915, %v922
      %v930 = vmul.f32 %v916, %v926
      %v931 = vadd.f32 %v902, %v929
      %v932 = vadd.f32 %v903, %v930
      %933 = vrot.lane.b32.xlu0 %v471, 113
      %v934 = vpop.permute.xlu0 %933
      %935 = vrot.lane.b32.xlu0 %v472, 113
      %v936 = vpop.permute.xlu0 %935
      %vm937 = vcmp.lt.s32.totalorder %v478, 113
      %v938 = vsel %vm937, %v934, %v936
      %v939 = vsel %vm937, %v936, %v934
      %940 = vset.pattern.permute.xlu0 16
      %941 = vperm.xlu0 %940, %v335
      %v942 = vpop.permute.xlu0 %941
      %v944 = vmul.f32 %v938, %v942
      %v945 = vmul.f32 %v939, %v942
      %v946 = vmul.f32 %v363, %v381
      %v948 = vlaneseq
      %v949 = vshrl.u32 %v948, 7
      %v950 = vsub.s32 0, %v949
      %v951 = vrot.slane %v946, %v950
      %v952 = vlaneseq
      %v953 = vshrl.u32 %v952, 7
      %v954 = vsub.s32 1, %v953
      %v955 = vrot.slane %v946, %v954
      %v958 = vmul.f32 %v944, %v951
      %v959 = vmul.f32 %v945, %v955
      %v960 = vadd.f32 %v931, %v958
      %v961 = vadd.f32 %v932, %v959
      %962 = vrot.lane.b32.xlu0 %v471, 112
      %v963 = vpop.permute.xlu0 %962
      %964 = vrot.lane.b32.xlu0 %v472, 112
      %v965 = vpop.permute.xlu0 %964
      %vm966 = vcmp.lt.s32.totalorder %v478, 112
      %v967 = vsel %vm966, %v963, %v965
      %v968 = vsel %vm966, %v965, %v963
      %969 = vset.pattern.permute.xlu0 17
      %970 = vperm.xlu0 %969, %v335
      %v971 = vpop.permute.xlu0 %970
      %v973 = vmul.f32 %v967, %v971
      %v974 = vmul.f32 %v968, %v971
      %v975 = vmul.f32 %v363, %v386
      %v977 = vlaneseq
      %v978 = vshrl.u32 %v977, 7
      %v979 = vsub.s32 0, %v978
      %v980 = vrot.slane %v975, %v979
      %v981 = vlaneseq
      %v982 = vshrl.u32 %v981, 7
      %v983 = vsub.s32 1, %v982
      %v984 = vrot.slane %v975, %v983
      %v987 = vmul.f32 %v973, %v980
      %v988 = vmul.f32 %v974, %v984
      %v989 = vadd.f32 %v960, %v987
      %v990 = vadd.f32 %v961, %v988
      %991 = vrot.lane.b32.xlu0 %v471, 111
      %v992 = vpop.permute.xlu0 %991
      %993 = vrot.lane.b32.xlu0 %v472, 111
      %v994 = vpop.permute.xlu0 %993
      %vm995 = vcmp.lt.s32.totalorder %v478, 111
      %v996 = vsel %vm995, %v992, %v994
      %v997 = vsel %vm995, %v994, %v992
      %998 = vset.pattern.permute.xlu0 18
      %999 = vperm.xlu0 %998, %v335
      %v1000 = vpop.permute.xlu0 %999
      %v1002 = vmul.f32 %v996, %v1000
      %v1003 = vmul.f32 %v997, %v1000
      %v1004 = vmul.f32 %v363, %v392
      %v1006 = vlaneseq
      %v1007 = vshrl.u32 %v1006, 7
      %v1008 = vsub.s32 0, %v1007
      %v1009 = vrot.slane %v1004, %v1008
      %v1010 = vlaneseq
      %v1011 = vshrl.u32 %v1010, 7
      %v1012 = vsub.s32 1, %v1011
      %v1013 = vrot.slane %v1004, %v1012
      %v1016 = vmul.f32 %v1002, %v1009
      %v1017 = vmul.f32 %v1003, %v1013
      %v1018 = vadd.f32 %v989, %v1016
      %v1019 = vadd.f32 %v990, %v1017
      %1020 = vrot.lane.b32.xlu0 %v471, 110
      %v1021 = vpop.permute.xlu0 %1020
      %1022 = vrot.lane.b32.xlu0 %v472, 110
      %v1023 = vpop.permute.xlu0 %1022
      %vm1024 = vcmp.lt.s32.totalorder %v478, 110
      %v1025 = vsel %vm1024, %v1021, %v1023
      %v1026 = vsel %vm1024, %v1023, %v1021
      %1027 = vset.pattern.permute.xlu0 19
      %1028 = vperm.xlu0 %1027, %v335
      %v1029 = vpop.permute.xlu0 %1028
      %v1031 = vmul.f32 %v1025, %v1029
      %v1032 = vmul.f32 %v1026, %v1029
      %v1033 = vmul.f32 %v363, %v398
      %v1035 = vlaneseq
      %v1036 = vshrl.u32 %v1035, 7
      %v1037 = vsub.s32 0, %v1036
      %v1038 = vrot.slane %v1033, %v1037
      %v1039 = vlaneseq
      %v1040 = vshrl.u32 %v1039, 7
      %v1041 = vsub.s32 1, %v1040
      %v1042 = vrot.slane %v1033, %v1041
      %v1045 = vmul.f32 %v1031, %v1038
      %v1046 = vmul.f32 %v1032, %v1042
      %v1047 = vadd.f32 %v1018, %v1045
      %v1048 = vadd.f32 %v1019, %v1046
      %1049 = vrot.lane.b32.xlu0 %v471, 98
      %v1050 = vpop.permute.xlu0 %1049
      %1051 = vrot.lane.b32.xlu0 %v472, 98
      %v1052 = vpop.permute.xlu0 %1051
      %vm1053 = vcmp.lt.s32.totalorder %v478, 98
      %v1054 = vsel %vm1053, %v1050, %v1052
      %v1055 = vsel %vm1053, %v1052, %v1050
      %1056 = vset.pattern.permute.xlu0 20
      %1057 = vperm.xlu0 %1056, %v335
      %v1058 = vpop.permute.xlu0 %1057
      %v1060 = vmul.f32 %v1054, %v1058
      %v1061 = vmul.f32 %v1055, %v1058
      %v1062 = vmul.f32 %v369, %v375
      %v1064 = vlaneseq
      %v1065 = vshrl.u32 %v1064, 7
      %v1066 = vsub.s32 0, %v1065
      %v1067 = vrot.slane %v1062, %v1066
      %v1068 = vlaneseq
      %v1069 = vshrl.u32 %v1068, 7
      %v1070 = vsub.s32 1, %v1069
      %v1071 = vrot.slane %v1062, %v1070
      %v1074 = vmul.f32 %v1060, %v1067
      %v1075 = vmul.f32 %v1061, %v1071
      %v1076 = vadd.f32 %v1047, %v1074
      %v1077 = vadd.f32 %v1048, %v1075
      %1078 = vrot.lane.b32.xlu0 %v471, 97
      %v1079 = vpop.permute.xlu0 %1078
      %1080 = vrot.lane.b32.xlu0 %v472, 97
      %v1081 = vpop.permute.xlu0 %1080
      %vm1082 = vcmp.lt.s32.totalorder %v478, 97
      %v1083 = vsel %vm1082, %v1079, %v1081
      %v1084 = vsel %vm1082, %v1081, %v1079
      %1085 = vset.pattern.permute.xlu0 21
      %1086 = vperm.xlu0 %1085, %v335
      %v1087 = vpop.permute.xlu0 %1086
      %v1089 = vmul.f32 %v1083, %v1087
      %v1090 = vmul.f32 %v1084, %v1087
      %v1091 = vmul.f32 %v369, %v381
      %v1093 = vlaneseq
      %v1094 = vshrl.u32 %v1093, 7
      %v1095 = vsub.s32 0, %v1094
      %v1096 = vrot.slane %v1091, %v1095
      %v1097 = vlaneseq
      %v1098 = vshrl.u32 %v1097, 7
      %v1099 = vsub.s32 1, %v1098
      %v1100 = vrot.slane %v1091, %v1099
      %v1103 = vmul.f32 %v1089, %v1096
      %v1104 = vmul.f32 %v1090, %v1100
      %v1105 = vadd.f32 %v1076, %v1103
      %v1106 = vadd.f32 %v1077, %v1104
      %1107 = vrot.lane.b32.xlu0 %v471, 96
      %v1108 = vpop.permute.xlu0 %1107
      %1109 = vrot.lane.b32.xlu0 %v472, 96
      %v1110 = vpop.permute.xlu0 %1109
      %vm1111 = vcmp.lt.s32.totalorder %v478, 96
      %v1112 = vsel %vm1111, %v1108, %v1110
      %v1113 = vsel %vm1111, %v1110, %v1108
      %1114 = vset.pattern.permute.xlu0 22
      %1115 = vperm.xlu0 %1114, %v335
      %v1116 = vpop.permute.xlu0 %1115
      %v1118 = vmul.f32 %v1112, %v1116
      %v1119 = vmul.f32 %v1113, %v1116
      %v1120 = vmul.f32 %v369, %v386
      %v1122 = vlaneseq
      %v1123 = vshrl.u32 %v1122, 7
      %v1124 = vsub.s32 0, %v1123
      %v1125 = vrot.slane %v1120, %v1124
      %v1126 = vlaneseq
      %v1127 = vshrl.u32 %v1126, 7
      %v1128 = vsub.s32 1, %v1127
      %v1129 = vrot.slane %v1120, %v1128
      %v1132 = vmul.f32 %v1118, %v1125
      %v1133 = vmul.f32 %v1119, %v1129
      %v1134 = vadd.f32 %v1105, %v1132
      %v1135 = vadd.f32 %v1106, %v1133
      %1136 = vrot.lane.b32.xlu0 %v471, 95
      %v1137 = vpop.permute.xlu0 %1136
      %1138 = vrot.lane.b32.xlu0 %v472, 95
      %v1139 = vpop.permute.xlu0 %1138
      %vm1140 = vcmp.lt.s32.totalorder %v478, 95
      %v1141 = vsel %vm1140, %v1137, %v1139
      %v1142 = vsel %vm1140, %v1139, %v1137
      %1143 = vset.pattern.permute.xlu0 23
      %1144 = vperm.xlu0 %1143, %v335
      %v1145 = vpop.permute.xlu0 %1144
      %v1147 = vmul.f32 %v1141, %v1145
      %v1148 = vmul.f32 %v1142, %v1145
      %v1149 = vmul.f32 %v369, %v392
      %v1151 = vlaneseq
      %v1152 = vshrl.u32 %v1151, 7
      %v1153 = vsub.s32 0, %v1152
      %v1154 = vrot.slane %v1149, %v1153
      %v1155 = vlaneseq
      %v1156 = vshrl.u32 %v1155, 7
      %v1157 = vsub.s32 1, %v1156
      %v1158 = vrot.slane %v1149, %v1157
      %v1161 = vmul.f32 %v1147, %v1154
      %v1162 = vmul.f32 %v1148, %v1158
      %v1163 = vadd.f32 %v1134, %v1161
      %v1164 = vadd.f32 %v1135, %v1162
      %1165 = vrot.lane.b32.xlu0 %v471, 94
      %v1166 = vpop.permute.xlu0 %1165
      %1167 = vrot.lane.b32.xlu0 %v472, 94
      %v1168 = vpop.permute.xlu0 %1167
      %vm1169 = vcmp.lt.s32.totalorder %v478, 94
      %v1170 = vsel %vm1169, %v1166, %v1168
      %v1171 = vsel %vm1169, %v1168, %v1166
      %1172 = vset.pattern.permute.xlu0 24
      %1173 = vperm.xlu0 %1172, %v335
      %v1174 = vpop.permute.xlu0 %1173
      %v1176 = vmul.f32 %v1170, %v1174
      %v1177 = vmul.f32 %v1171, %v1174
      %v1178 = vmul.f32 %v369, %v398
      %v1180 = vlaneseq
      %v1181 = vshrl.u32 %v1180, 7
      %v1182 = vsub.s32 0, %v1181
      %v1183 = vrot.slane %v1178, %v1182
      %v1184 = vlaneseq
      %v1185 = vshrl.u32 %v1184, 7
      %v1186 = vsub.s32 1, %v1185
      %v1187 = vrot.slane %v1178, %v1186
      %v1190 = vmul.f32 %v1176, %v1183
      %v1191 = vmul.f32 %v1177, %v1187
      %v1192 = vadd.f32 %v1163, %v1190
      %v1193 = vadd.f32 %v1164, %v1191
      %1195 = vset.pattern.permute.xlu0 0
      %1196 = vperm.xlu0 %1195, %v336
      %v1197 = vpop.permute.xlu0 %1196
      %v1199 = vadd.f32 %v1192, %v1197
      %v1200 = vadd.f32 %v1193, %v1197
      %1202 = vset.pattern.permute.xlu0 0
      %1203 = vperm.xlu0 %1202, %v337
      %v1204 = vpop.permute.xlu0 %1203
      %v1206 = vlaneseq
      %v1207 = vshrl.u32 %v1206, 7
      %v1208 = vsub.s32 0, %v1207
      %v1209 = vrot.slane %v1199, %v1208
      %v1210 = vlaneseq
      %v1211 = vshrl.u32 %v1210, 7
      %v1212 = vsub.s32 0, %v1211
      %v1213 = vrot.slane %v1200, %v1212
      %v1214 = vmul.f32 %v1204, %v1209
      %v1215 = vmul.f32 %v1204, %v1213
      %1216 = vset.pattern.permute.xlu0 1
      %1217 = vperm.xlu0 %1216, %v337
      %v1218 = vpop.permute.xlu0 %1217
      %v1220 = vlaneseq
      %v1221 = vshrl.u32 %v1220, 7
      %v1222 = vsub.s32 1, %v1221
      %v1223 = vrot.slane %v1199, %v1222
      %v1224 = vlaneseq
      %v1225 = vshrl.u32 %v1224, 7
      %v1226 = vsub.s32 1, %v1225
      %v1227 = vrot.slane %v1200, %v1226
      %v1228 = vmul.f32 %v1218, %v1223
      %v1229 = vmul.f32 %v1218, %v1227
      %v1230 = vadd.f32 %v1214, %v1228
      %v1231 = vadd.f32 %v1215, %v1229
      %1232 = vset.pattern.permute.xlu0 2
      %1233 = vperm.xlu0 %1232, %v337
      %v1234 = vpop.permute.xlu0 %1233
      %v1236 = vlaneseq
      %v1237 = vshrl.u32 %v1236, 7
      %v1238 = vsub.s32 2, %v1237
      %v1239 = vrot.slane %v1199, %v1238
      %v1240 = vlaneseq
      %v1241 = vshrl.u32 %v1240, 7
      %v1242 = vsub.s32 2, %v1241
      %v1243 = vrot.slane %v1200, %v1242
      %v1244 = vmul.f32 %v1234, %v1239
      %v1245 = vmul.f32 %v1234, %v1243
      %v1246 = vadd.f32 %v1230, %v1244
      %v1247 = vadd.f32 %v1231, %v1245
      %1248 = vset.pattern.permute.xlu0 3
      %1249 = vperm.xlu0 %1248, %v337
      %v1250 = vpop.permute.xlu0 %1249
      %v1252 = vlaneseq
      %v1253 = vshrl.u32 %v1252, 7
      %v1254 = vsub.s32 3, %v1253
      %v1255 = vrot.slane %v1199, %v1254
      %v1256 = vlaneseq
      %v1257 = vshrl.u32 %v1256, 7
      %v1258 = vsub.s32 3, %v1257
      %v1259 = vrot.slane %v1200, %v1258
      %v1260 = vmul.f32 %v1250, %v1255
      %v1261 = vmul.f32 %v1250, %v1259
      %v1262 = vadd.f32 %v1246, %v1260
      %v1263 = vadd.f32 %v1247, %v1261
      %1265 = vset.pattern.permute.xlu0 0
      %1266 = vperm.xlu0 %1265, %v338
      %v1267 = vpop.permute.xlu0 %1266
      %v1269 = vadd.f32 %v1262, %v1267
      %v1270 = vadd.f32 %v1263, %v1267
      %v1271 = vmax.f32 %v1269, 0.0
      %v1272 = vmax.f32 %v1270, 0.0
      %v1275 = vcombine.low %v399, %v400
      %v1277 = vunpack.c.l.s4 1966171168
      %v1278 = vunpack.c.0.s8 %v1277
      %v1279 = vlaneseq
      %v1280 = vshrl.u32 %v1279, 7
      %v1281 = vsub.s32 %v1278, %v1280
      %v1282 = vrot.slane %v1275, %v1281
      %v1284 = vunpack.c.l.s4 1966171168
      %v1285 = vunpack.c.0.s8 %v1284
      %v1286 = vlaneseq
      %v1287 = vshrl.u32 %v1286, 7
      %v1288 = vsub.s32 %v1285, %v1287
      %v1289 = vrot.slane %v1282, %v1288
      %v1291 = vlaneseq
      %vm1292 = vcmp.ge.s32.totalorder %v1291, 0
      %vm1293 = vcmp.lt.s32.totalorder %v1291, 256
      %vm1294 = vmand %vm1292, %vm1293
      %1295 = vst.msk [vmem:[%s332] ss:$8 sm:$0x3] %vm1294, %v1289
      %1296 = vst.msk [vmem:[%s332] ss:$8 sm:$0x0] %vm1294, %v1289
      %v1299 = vcombine.low %v1271, %v1272
      %v1301 = vunpack.c.l.s4 1966171168
      %v1302 = vunpack.c.0.s8 %v1301
      %v1303 = vlaneseq
      %v1304 = vshrl.u32 %v1303, 7
      %v1305 = vsub.s32 %v1302, %v1304
      %v1306 = vrot.slane %v1299, %v1305
      %v1308 = vunpack.c.l.s4 1966171168
      %v1309 = vunpack.c.0.s8 %v1308
      %v1310 = vlaneseq
      %v1311 = vshrl.u32 %v1310, 7
      %v1312 = vsub.s32 %v1309, %v1311
      %v1313 = vrot.slane %v1306, %v1312
      %s1315 = scalar_lea.vmem %s332, 1
      %1316 = vst.msk [vmem:[%s1315] ss:$8 sm:$0x3] %vm1294, %v1313
      %1317 = vst.msk [vmem:[%s1315] ss:$8 sm:$0x0] %vm1294, %v1313
      %v1318 = vcombine.high %v1282, %v1282
      %v1320 = vunpack.c.l.s4 1966171168
      %v1321 = vunpack.c.0.s8 %v1320
      %v1322 = vlaneseq
      %v1323 = vshrl.u32 %v1322, 7
      %v1324 = vsub.s32 %v1321, %v1323
      %v1325 = vrot.slane %v1318, %v1324
      %s1327 = scalar_lea.vmem %s332, 2
      %1328 = vst.msk [vmem:[%s1327] ss:$8 sm:$0x3] %vm1294, %v1325
      %1329 = vst.msk [vmem:[%s1327] ss:$8 sm:$0x0] %vm1294, %v1325
      %v1330 = vcombine.high %v1306, %v1306
      %v1332 = vunpack.c.l.s4 1966171168
      %v1333 = vunpack.c.0.s8 %v1332
      %v1334 = vlaneseq
      %v1335 = vshrl.u32 %v1334, 7
      %v1336 = vsub.s32 %v1333, %v1335
      %v1337 = vrot.slane %v1330, %v1336
      %s1339 = scalar_lea.vmem %s332, 3
      %1340 = vst.msk [vmem:[%s1339] ss:$8 sm:$0x3] %vm1294, %v1337
      %1341 = vst.msk [vmem:[%s1339] ss:$8 sm:$0x0] %vm1294, %v1337
      %v1342 = vcombine.high %v1289, %v1289
      %s1344 = scalar_lea.vmem %s332, 4
      %1345 = vst.msk [vmem:[%s1344] ss:$8 sm:$0x3] %vm1294, %v1342
      %1346 = vst.msk [vmem:[%s1344] ss:$8 sm:$0x0] %vm1294, %v1342
      %v1347 = vcombine.high %v1313, %v1313
      %s1349 = scalar_lea.vmem %s332, 5
      %1350 = vst.msk [vmem:[%s1349] ss:$8 sm:$0x3] %vm1294, %v1347
      %1351 = vst.msk [vmem:[%s1349] ss:$8 sm:$0x0] %vm1294, %v1347
      %v1352 = vcombine.high %v1325, %v1325
      %s1354 = scalar_lea.vmem %s332, 6
      %1355 = vst.msk [vmem:[%s1354] ss:$8 sm:$0x3] %vm1294, %v1352
      %1356 = vst.msk [vmem:[%s1354] ss:$8 sm:$0x0] %vm1294, %v1352
      %v1357 = vcombine.high %v1337, %v1337
      %s1359 = scalar_lea.vmem %s332, 7
      %1360 = vst.msk [vmem:[%s1359] ss:$8 sm:$0x3] %vm1294, %v1357
      %1361 = vst.msk [vmem:[%s1359] ss:$8 sm:$0x0] %vm1294, %v1357
      %p1362 = scmp.lt.s32.totalorder %s20, 1
      %s1363 = scalar_select %p1362, %s20, 1
      %s1364 = smul.addr %s1363, 2
      %s1365 = smul.addr %s1364, 8
      %s1366 = scalar_lea.vmem %s9, %s1365
      // Predicated region
      $region57: #{basic_block_forward.1} parent=55 // pred_check
        %p1367 = pneg %p232
      $region58: #{basic_block_forward.1} parent=55 // pred_check_branch
        %1369 = sbr.rel (%p1367) target = $region60
      $region59: #{basic_block_forward.1} parent=55 // pred_region
        _
      $region60: #{basic_block_forward.1} parent=55 // pred_fallthru
        _
    $region56: #{basic_block_forward.1} parent=5 // pred_fallthru
      _
    %p1370 = scmp.le.s32.totalorder 2, %s15
    // Predicated region
    $region61: #{basic_block_forward.1} parent=5 // pred_check
      %p1371 = pneg %p1370
    $region62: #{basic_block_forward.1} parent=5 // pred_check_branch
      %1373 = sbr.rel (%p1371) target = $region64
    $region63: #{basic_block_forward.1} parent=5 // pred_region
      %s1374 = ssub.s32 %s15, 2
      // Predicated region
      $region65: #{basic_block_forward.1} parent=63 // pred_check
        %p1375 = pneg %p238
      $region66: #{basic_block_forward.1} parent=63 // pred_check_branch
        %1377 = sbr.rel (%p1375) target = $region68
      $region67: #{basic_block_forward.1} parent=63 // pred_region
        %p1378 = scmp.lt.s32.totalorder %s21, 1
        %s1379 = scalar_select %p1378, %s21, 1
        %s1380 = smul.addr %s1379, 2
        %s1381 = smul.addr %s1380, 8
        %s1382 = scalar_lea.vmem %s9, %s1381
      $region68: #{basic_block_forward.1} parent=63 // pred_fallthru
        _
    $region64: #{basic_block_forward.1} parent=5 // pred_fallthru
      _
  $region6: #{basic_block_forward.1} parent=0 // loop_footer
    %s19 = sadd.s32 1, %s15
  $region7: #{basic_block_forward.1} parent=0 // loop_footer_branch
    %14 = sbr.rel target = $region3
  $region8: #{basic_block_forward.1} parent=0 // loop_exit
    _

</llo_original>
